<compile_context>
chip_gen: v6e
topology: v6e:2x2x1
jax: 0.10.0
libtpu: 0.0.40
codegen_flags: <defaults>
</compile_context>

<pallas_src>
import functools
import math

import jax
import jax.numpy as jnp
from jax.experimental import pallas as pl
from jax.experimental.pallas import tpu as pltpu


# ----------------------------- helpers -----------------------------

def _round_up(a, b):
    return (a + b - 1) // b * b


def _pick_tn(np_):
    for t in (512, 256, 128):
        if np_ % t == 0:
            return t
    return np_  # np_ is always a multiple of 128


# ----------------------------- kernel -----------------------------

def _kan_linear_kernel(x_ref, knots_ref, wb_ref, ws_ref, o_ref, *,
                       spline_order, mm_dtype):
    # x_ref:     (tm, Kp)      f32   input row tile
    # knots_ref: (G, Kp)       f32   spline knots, per (padded) input feature
    # wb_ref:    (Kp, tn)      bf16  base weight (transposed, padded)
    # ws_ref:    (C, Kp, tn)   bf16  scaled spline weight, coefficient-major
    # o_ref:     (tm, tn)      f32
    x = x_ref[...]
    g = knots_ref[...]
    num_knots = g.shape[0]

    def row(j):                      # (1, Kp) knot row, broadcasts over tm
        return g[j:j + 1, :]

    # Order-0 bases: indicator of [g_j, g_{j+1})
    bases = []
    for j in range(num_knots - 1):
        inside = (x >= row(j)) & (x < row(j + 1))
        bases.append(inside.astype(jnp.float32))

    # Cox-de Boor recursion (all 2-D (tm, Kp) elementwise ops on the VPU)
    for k in range(1, spline_order + 1):
        nxt = []
        for j in range(len(bases) - 1):
            left_inv = 1.0 / (row(j + k) - row(j))          # (1, Kp), knot-only
            right_inv = 1.0 / (row(j + k + 1) - row(j + 1))
            left = (x - row(j)) * left_inv
            right = (row(j + k + 1) - x) * right_inv
            nxt.append(left * bases[j] + right * bases[j + 1])
        bases = nxt
    # len(bases) == grid_size + spline_order == C

    # Base path: silu(x) @ Wb   (bf16 operands, f32 MXU accumulation)
    silu_x = x * (1.0 / (1.0 + jnp.exp(-x)))
    acc = jnp.dot(silu_x.astype(mm_dtype), wb_ref[...],
                  preferred_element_type=jnp.float32)

    # Spline path: sum_c  B_c(x) @ Ws[c]
    for c in range(len(bases)):
        acc += jnp.dot(bases[c].astype(mm_dtype), ws_ref[c],
                       preferred_element_type=jnp.float32)

    o_ref[...] = acc.astype(o_ref.dtype)


# ----------------------------- wrapper -----------------------------

def kan_linear_forward(x, layer_params, *, grid_size, spline_order,
                       tm=256, mm_dtype=jnp.bfloat16):
    """x: (M, in_features) f32 -> (M, out_features) f32 for one KANLinear layer."""
    M, K = x.shape
    base_w = layer_params["base_weight"]        # (N, K)
    spline_w = layer_params["spline_weight"]    # (N, K, C)
    scaler = layer_params["spline_scaler"]      # (N, K)
    knots = layer_params["knots"]               # (K, G)

    N = base_w.shape[0]
    C = grid_size + spline_order
    G = grid_size + 2 * spline_order + 1
    assert knots.shape == (K, G) and spline_w.shape == (N, K, C)

    # --- pad to lane-dense, MXU-friendly shapes ---
    Kp = _round_up(K, 128)
    Np = _round_up(N, 128)
    tm_eff = max(8, min(_round_up(tm, 8), _round_up(M, 8)))
    Mp = _round_up(M, tm_eff)

    x_p = jnp.zeros((Mp, Kp), jnp.float32).at[:M, :K].set(x.astype(jnp.float32))
    # pad knots with 'edge' (valid, strictly-increasing rows) so padded features never
    # divide by zero; their weights are zero so they don't touch the output.
    knots_p = jnp.pad(knots.astype(jnp.float32), ((0, Kp - K), (0, 0)), mode="edge")
    knots_t = knots_p.T                                            # (G, Kp)

    # fold the standalone spline scaler once per call (parameter-sized, not per tile)
    scaled_spline = spline_w * scaler[:, :, None]                  # (N, K, C)

    wb = (jnp.zeros((Kp, Np), jnp.float32)
          .at[:K, :N].set(base_w.T.astype(jnp.float32))).astype(mm_dtype)
    ws = (jnp.zeros((C, Kp, Np), jnp.float32)
          .at[:, :K, :N].set(jnp.transpose(scaled_spline, (2, 1, 0)))).astype(mm_dtype)

    tn = _pick_tn(Np)
    grid = (Mp // tm_eff, Np // tn)

    kernel = functools.partial(_kan_linear_kernel,
                               spline_order=spline_order, mm_dtype=mm_dtype)

    out = pl.pallas_call(
        kernel,
        out_shape=jax.ShapeDtypeStruct((Mp, Np), jnp.float32),
        grid_spec=pltpu.PrefetchScalarGridSpec(
            num_scalar_prefetch=0,
            grid=grid,
            in_specs=[
                pl.BlockSpec((tm_eff, Kp), lambda i, j: (i, 0)),     # x row tile
                pl.BlockSpec((G, Kp), lambda i, j: (0, 0)),          # knots (resident)
                pl.BlockSpec((Kp, tn), lambda i, j: (0, j)),         # base weight
                pl.BlockSpec((C, Kp, tn), lambda i, j: (0, 0, j)),   # spline weight
            ],
            out_specs=pl.BlockSpec((tm_eff, tn), lambda i, j: (i, j)),
        ),
        compiler_params=pltpu.CompilerParams(
            # both axes independent -> v7x megacore shards them; no-op on v5e/v6e
            dimension_semantics=("parallel", "parallel")),
    )(x_p, knots_t, wb, ws)

    return out[:M, :N]


def kan_forward(x, params, *, grid_size, spline_order, tm=256, mm_dtype=jnp.bfloat16):
    for p in params:
        x = kan_linear_forward(x, p, grid_size=grid_size, spline_order=spline_order,
                               tm=tm, mm_dtype=mm_dtype)
    return x


# ----------------------------- params -----------------------------

def init_kan_params(key, layers_hidden, *, grid_size=5, spline_order=3,
                    grid_range=(-1.0, 1.0), scale_base=1.0, scale_spline=1.0):
    """Deterministic, simplified init (kaiming-uniform-style bounds).
    Forward semantics are unchanged; the exact lstsq-based spline init is init-only."""
    params = []
    G = grid_size + 2 * spline_order + 1
    C = grid_size + spline_order
    h = (grid_range[1] - grid_range[0]) / grid_size
    base_knots = (jnp.arange(-spline_order, grid_size + spline_order + 1,
                             dtype=jnp.float32) * h + grid_range[0])   # (G,)
    for fin, fout in zip(layers_hidden[:-1], layers_hidden[1:]):
        key, k1, k2, k3 = jax.random.split(key, 4)
        bound = math.sqrt(3.0 / fin)
        base_w = scale_base * jax.random.uniform(
            k1, (fout, fin), minval=-bound, maxval=bound, dtype=jnp.float32)
        spline_w = jax.random.uniform(
            k2, (fout, fin, C), minval=-0.1, maxval=0.1, dtype=jnp.float32)
        spline_scaler = scale_spline * jax.random.uniform(
            k3, (fout, fin), minval=-bound, maxval=bound, dtype=jnp.float32)
        knots = jnp.broadcast_to(base_knots, (fin, G))
        params.append(dict(base_weight=base_w, spline_weight=spline_w,
                           spline_scaler=spline_scaler, knots=knots))
    return params


# ----------------------------- pure-JAX reference -----------------------------

def _b_splines_ref(x, knots, spline_order):
    # x: (M, K), knots: (K, G) -> (M, K, C)
    x_ = x[:, :, None]
    g = knots[None, :, :]
    bases = ((x_ >= g[:, :, :-1]) & (x_ < g[:, :, 1:])).astype(jnp.float32)
    for k in range(1, spline_order + 1):
        bases = ((x_ - g[:, :, :-(k + 1)]) / (g[:, :, k:-1] - g[:, :, :-(k + 1)])
                 * bases[:, :, :-1]
                 + (g[:, :, k + 1:] - x_) / (g[:, :, k + 1:] - g[:, :, 1:-k])
                 * bases[:, :, 1:])
    return bases


def _kan_linear_ref(x, p, *, grid_size, spline_order, mm_dtype):
    base_w, spline_w = p["base_weight"], p["spline_weight"]
    scaler, knots = p["spline_scaler"], p["knots"]
    N = base_w.shape[0]
    silu_x = x * (1.0 / (1.0 + jnp.exp(-x)))
    base_out = jnp.dot(silu_x.astype(mm_dtype), base_w.T.astype(mm_dtype),
                       preferred_element_type=jnp.float32)
    bases = _b_splines_ref(x, knots, spline_order)                 # (M, K, C)
    scaled = spline_w * scaler[:, :, None]                          # (N, K, C)
    spline_out = jnp.dot(bases.reshape(x.shape[0], -1).astype(mm_dtype),
                         scaled.reshape(N, -1).T.astype(mm_dtype),
                         preferred_element_type=jnp.float32)
    return base_out + spline_out


def kan_forward_ref(x, params, *, grid_size, spline_order, mm_dtype=jnp.bfloat16):
    for p in params:
        x = _kan_linear_ref(x, p, grid_size=grid_size, spline_order=spline_order,
                            mm_dtype=mm_dtype)
    return x


# ----------------------------- demo -----------------------------

if __name__ == "__main__":
    key = jax.random.PRNGKey(0)
    k_x, k_p = jax.random.split(key)

    batch = 16
    input_dim, hidden_dim, output_dim = 1, 32, 1
    num_layers = 2
    grid_size, spline_order = 5, 3     # KANLinear defaults

    layers_hidden = [input_dim] + [hidden_dim] * num_layers + [output_dim]
    params = init_kan_params(k_p, layers_hidden,
                             grid_size=grid_size, spline_order=spline_order)

    x = jax.random.uniform(k_x, (batch, input_dim),
                           minval=-1.0, maxval=1.0, dtype=jnp.float32)

    out = kan_forward(x, params, grid_size=grid_size, spline_order=spline_order)
    out = jax.block_until_ready(out)

    ref = kan_forward_ref(x, params, grid_size=grid_size, spline_order=spline_order)
    assert out.shape == (batch, output_dim)
    err = float(jnp.max(jnp.abs(out - ref)))
    assert jnp.allclose(out, ref, atol=1e-3, rtol=1e-2), f"mismatch vs reference: {err}"

    print("KERNEL_OK")
</pallas_src>

<mosaic_0001>
module attributes {stable_mosaic.version = 11 : i64} {
  func.func @_kan_linear_kernel(%arg0: i32, %arg1: i32, %arg2: memref<16x128xf32, #tpu.memory_space<vmem>>, %arg3: memref<12x128xf32, #tpu.memory_space<vmem>>, %arg4: memref<128x128xbf16, #tpu.memory_space<vmem>>, %arg5: memref<8x128x128xbf16, #tpu.memory_space<vmem>>, %arg6: memref<16x128xf32, #tpu.memory_space<vmem>>) attributes {dimension_semantics = [#tpu.dimension_semantics<parallel>, #tpu.dimension_semantics<parallel>], iteration_bounds = array<i64: 1, 1>, scalar_prefetch = 0 : i64, scratch_operands = 0 : i64, tpu.core_type = #tpu.core_type<tc>, window_params = [{transform_indices = @transform_0, window_bounds = array<i64: 16, 128>}, {pipeline_mode = #tpu.pipeline_mode<synchronous>, transform_indices = @transform_1, window_bounds = array<i64: 12, 128>}, {transform_indices = @transform_2, window_bounds = array<i64: 128, 128>}, {transform_indices = @transform_3, window_bounds = array<i64: 8, 128, 128>}, {transform_indices = @transform_4, window_bounds = array<i64: 16, 128>}]} {
    %c0 = arith.constant 0 : index
    %c0_0 = arith.constant 0 : index
    %0 = vector.load %arg2[%c0, %c0_0] : memref<16x128xf32, #tpu.memory_space<vmem>>, vector<16x128xf32>
    %c0_1 = arith.constant 0 : index
    %c0_2 = arith.constant 0 : index
    %1 = vector.load %arg3[%c0_1, %c0_2] : memref<12x128xf32, #tpu.memory_space<vmem>>, vector<12x128xf32>
    %2 = vector.extract_strided_slice %1 {offsets = [0, 0], sizes = [1, 128], strides = [1, 1]} : vector<12x128xf32> to vector<1x128xf32>
    %3 = vector.broadcast %2 : vector<1x128xf32> to vector<16x128xf32>
    %4 = arith.cmpf oge, %0, %3 : vector<16x128xf32>
    %5 = vector.extract_strided_slice %1 {offsets = [1, 0], sizes = [1, 128], strides = [1, 1]} : vector<12x128xf32> to vector<1x128xf32>
    %6 = vector.broadcast %5 : vector<1x128xf32> to vector<16x128xf32>
    %7 = arith.cmpf olt, %0, %6 : vector<16x128xf32>
    %8 = arith.andi %4, %7 : vector<16x128xi1>
    %9 = arith.extui %8 : vector<16x128xi1> to vector<16x128xi32>
    %10 = arith.sitofp %9 : vector<16x128xi32> to vector<16x128xf32>
    %11 = vector.extract_strided_slice %1 {offsets = [1, 0], sizes = [1, 128], strides = [1, 1]} : vector<12x128xf32> to vector<1x128xf32>
    %12 = vector.broadcast %11 : vector<1x128xf32> to vector<16x128xf32>
    %13 = arith.cmpf oge, %0, %12 : vector<16x128xf32>
    %14 = vector.extract_strided_slice %1 {offsets = [2, 0], sizes = [1, 128], strides = [1, 1]} : vector<12x128xf32> to vector<1x128xf32>
    %15 = vector.broadcast %14 : vector<1x128xf32> to vector<16x128xf32>
    %16 = arith.cmpf olt, %0, %15 : vector<16x128xf32>
    %17 = arith.andi %13, %16 : vector<16x128xi1>
    %18 = arith.extui %17 : vector<16x128xi1> to vector<16x128xi32>
    %19 = arith.sitofp %18 : vector<16x128xi32> to vector<16x128xf32>
    %20 = vector.extract_strided_slice %1 {offsets = [2, 0], sizes = [1, 128], strides = [1, 1]} : vector<12x128xf32> to vector<1x128xf32>
    %21 = vector.broadcast %20 : vector<1x128xf32> to vector<16x128xf32>
    %22 = arith.cmpf oge, %0, %21 : vector<16x128xf32>
    %23 = vector.extract_strided_slice %1 {offsets = [3, 0], sizes = [1, 128], strides = [1, 1]} : vector<12x128xf32> to vector<1x128xf32>
    %24 = vector.broadcast %23 : vector<1x128xf32> to vector<16x128xf32>
    %25 = arith.cmpf olt, %0, %24 : vector<16x128xf32>
    %26 = arith.andi %22, %25 : vector<16x128xi1>
    %27 = arith.extui %26 : vector<16x128xi1> to vector<16x128xi32>
    %28 = arith.sitofp %27 : vector<16x128xi32> to vector<16x128xf32>
    %29 = vector.extract_strided_slice %1 {offsets = [3, 0], sizes = [1, 128], strides = [1, 1]} : vector<12x128xf32> to vector<1x128xf32>
    %30 = vector.broadcast %29 : vector<1x128xf32> to vector<16x128xf32>
    %31 = arith.cmpf oge, %0, %30 : vector<16x128xf32>
    %32 = vector.extract_strided_slice %1 {offsets = [4, 0], sizes = [1, 128], strides = [1, 1]} : vector<12x128xf32> to vector<1x128xf32>
    %33 = vector.broadcast %32 : vector<1x128xf32> to vector<16x128xf32>
    %34 = arith.cmpf olt, %0, %33 : vector<16x128xf32>
    %35 = arith.andi %31, %34 : vector<16x128xi1>
    %36 = arith.extui %35 : vector<16x128xi1> to vector<16x128xi32>
    %37 = arith.sitofp %36 : vector<16x128xi32> to vector<16x128xf32>
    %38 = vector.extract_strided_slice %1 {offsets = [4, 0], sizes = [1, 128], strides = [1, 1]} : vector<12x128xf32> to vector<1x128xf32>
    %39 = vector.broadcast %38 : vector<1x128xf32> to vector<16x128xf32>
    %40 = arith.cmpf oge, %0, %39 : vector<16x128xf32>
    %41 = vector.extract_strided_slice %1 {offsets = [5, 0], sizes = [1, 128], strides = [1, 1]} : vector<12x128xf32> to vector<1x128xf32>
    %42 = vector.broadcast %41 : vector<1x128xf32> to vector<16x128xf32>
    %43 = arith.cmpf olt, %0, %42 : vector<16x128xf32>
    %44 = arith.andi %40, %43 : vector<16x128xi1>
    %45 = arith.extui %44 : vector<16x128xi1> to vector<16x128xi32>
    %46 = arith.sitofp %45 : vector<16x128xi32> to vector<16x128xf32>
    %47 = vector.extract_strided_slice %1 {offsets = [5, 0], sizes = [1, 128], strides = [1, 1]} : vector<12x128xf32> to vector<1x128xf32>
    %48 = vector.broadcast %47 : vector<1x128xf32> to vector<16x128xf32>
    %49 = arith.cmpf oge, %0, %48 : vector<16x128xf32>
    %50 = vector.extract_strided_slice %1 {offsets = [6, 0], sizes = [1, 128], strides = [1, 1]} : vector<12x128xf32> to vector<1x128xf32>
    %51 = vector.broadcast %50 : vector<1x128xf32> to vector<16x128xf32>
    %52 = arith.cmpf olt, %0, %51 : vector<16x128xf32>
    %53 = arith.andi %49, %52 : vector<16x128xi1>
    %54 = arith.extui %53 : vector<16x128xi1> to vector<16x128xi32>
    %55 = arith.sitofp %54 : vector<16x128xi32> to vector<16x128xf32>
    %56 = vector.extract_strided_slice %1 {offsets = [6, 0], sizes = [1, 128], strides = [1, 1]} : vector<12x128xf32> to vector<1x128xf32>
    %57 = vector.broadcast %56 : vector<1x128xf32> to vector<16x128xf32>
    %58 = arith.cmpf oge, %0, %57 : vector<16x128xf32>
    %59 = vector.extract_strided_slice %1 {offsets = [7, 0], sizes = [1, 128], strides = [1, 1]} : vector<12x128xf32> to vector<1x128xf32>
    %60 = vector.broadcast %59 : vector<1x128xf32> to vector<16x128xf32>
    %61 = arith.cmpf olt, %0, %60 : vector<16x128xf32>
    %62 = arith.andi %58, %61 : vector<16x128xi1>
    %63 = arith.extui %62 : vector<16x128xi1> to vector<16x128xi32>
    %64 = arith.sitofp %63 : vector<16x128xi32> to vector<16x128xf32>
    %65 = vector.extract_strided_slice %1 {offsets = [7, 0], sizes = [1, 128], strides = [1, 1]} : vector<12x128xf32> to vector<1x128xf32>
    %66 = vector.broadcast %65 : vector<1x128xf32> to vector<16x128xf32>
    %67 = arith.cmpf oge, %0, %66 : vector<16x128xf32>
    %68 = vector.extract_strided_slice %1 {offsets = [8, 0], sizes = [1, 128], strides = [1, 1]} : vector<12x128xf32> to vector<1x128xf32>
    %69 = vector.broadcast %68 : vector<1x128xf32> to vector<16x128xf32>
    %70 = arith.cmpf olt, %0, %69 : vector<16x128xf32>
    %71 = arith.andi %67, %70 : vector<16x128xi1>
    %72 = arith.extui %71 : vector<16x128xi1> to vector<16x128xi32>
    %73 = arith.sitofp %72 : vector<16x128xi32> to vector<16x128xf32>
    %74 = vector.extract_strided_slice %1 {offsets = [8, 0], sizes = [1, 128], strides = [1, 1]} : vector<12x128xf32> to vector<1x128xf32>
    %75 = vector.broadcast %74 : vector<1x128xf32> to vector<16x128xf32>
    %76 = arith.cmpf oge, %0, %75 : vector<16x128xf32>
    %77 = vector.extract_strided_slice %1 {offsets = [9, 0], sizes = [1, 128], strides = [1, 1]} : vector<12x128xf32> to vector<1x128xf32>
    %78 = vector.broadcast %77 : vector<1x128xf32> to vector<16x128xf32>
    %79 = arith.cmpf olt, %0, %78 : vector<16x128xf32>
    %80 = arith.andi %76, %79 : vector<16x128xi1>
    %81 = arith.extui %80 : vector<16x128xi1> to vector<16x128xi32>
    %82 = arith.sitofp %81 : vector<16x128xi32> to vector<16x128xf32>
    %83 = vector.extract_strided_slice %1 {offsets = [9, 0], sizes = [1, 128], strides = [1, 1]} : vector<12x128xf32> to vector<1x128xf32>
    %84 = vector.broadcast %83 : vector<1x128xf32> to vector<16x128xf32>
    %85 = arith.cmpf oge, %0, %84 : vector<16x128xf32>
    %86 = vector.extract_strided_slice %1 {offsets = [10, 0], sizes = [1, 128], strides = [1, 1]} : vector<12x128xf32> to vector<1x128xf32>
    %87 = vector.broadcast %86 : vector<1x128xf32> to vector<16x128xf32>
    %88 = arith.cmpf olt, %0, %87 : vector<16x128xf32>
    %89 = arith.andi %85, %88 : vector<16x128xi1>
    %90 = arith.extui %89 : vector<16x128xi1> to vector<16x128xi32>
    %91 = arith.sitofp %90 : vector<16x128xi32> to vector<16x128xf32>
    %92 = vector.extract_strided_slice %1 {offsets = [10, 0], sizes = [1, 128], strides = [1, 1]} : vector<12x128xf32> to vector<1x128xf32>
    %93 = vector.broadcast %92 : vector<1x128xf32> to vector<16x128xf32>
    %94 = arith.cmpf oge, %0, %93 : vector<16x128xf32>
    %95 = vector.extract_strided_slice %1 {offsets = [11, 0], sizes = [1, 128], strides = [1, 1]} : vector<12x128xf32> to vector<1x128xf32>
    %96 = vector.broadcast %95 : vector<1x128xf32> to vector<16x128xf32>
    %97 = arith.cmpf olt, %0, %96 : vector<16x128xf32>
    %98 = arith.andi %94, %97 : vector<16x128xi1>
    %99 = arith.extui %98 : vector<16x128xi1> to vector<16x128xi32>
    %100 = arith.sitofp %99 : vector<16x128xi32> to vector<16x128xf32>
    %101 = vector.extract_strided_slice %1 {offsets = [1, 0], sizes = [1, 128], strides = [1, 1]} : vector<12x128xf32> to vector<1x128xf32>
    %102 = vector.extract_strided_slice %1 {offsets = [0, 0], sizes = [1, 128], strides = [1, 1]} : vector<12x128xf32> to vector<1x128xf32>
    %103 = arith.subf %101, %102 : vector<1x128xf32>
    %cst = arith.constant 1.000000e+00 : f32
    %104 = vector.broadcast %cst : f32 to vector<1x128xf32>
    %105 = arith.divf %104, %103 : vector<1x128xf32>
    %106 = vector.extract_strided_slice %1 {offsets = [2, 0], sizes = [1, 128], strides = [1, 1]} : vector<12x128xf32> to vector<1x128xf32>
    %107 = vector.extract_strided_slice %1 {offsets = [1, 0], sizes = [1, 128], strides = [1, 1]} : vector<12x128xf32> to vector<1x128xf32>
    %108 = arith.subf %106, %107 : vector<1x128xf32>
    %cst_3 = arith.constant 1.000000e+00 : f32
    %109 = vector.broadcast %cst_3 : f32 to vector<1x128xf32>
    %110 = arith.divf %109, %108 : vector<1x128xf32>
    %111 = vector.extract_strided_slice %1 {offsets = [0, 0], sizes = [1, 128], strides = [1, 1]} : vector<12x128xf32> to vector<1x128xf32>
    %112 = vector.broadcast %111 : vector<1x128xf32> to vector<16x128xf32>
    %113 = arith.subf %0, %112 : vector<16x128xf32>
    %114 = vector.broadcast %105 : vector<1x128xf32> to vector<16x128xf32>
    %115 = arith.mulf %113, %114 : vector<16x128xf32>
    %116 = vector.extract_strided_slice %1 {offsets = [2, 0], sizes = [1, 128], strides = [1, 1]} : vector<12x128xf32> to vector<1x128xf32>
    %117 = vector.broadcast %116 : vector<1x128xf32> to vector<16x128xf32>
    %118 = arith.subf %117, %0 : vector<16x128xf32>
    %119 = vector.broadcast %110 : vector<1x128xf32> to vector<16x128xf32>
    %120 = arith.mulf %118, %119 : vector<16x128xf32>
    %121 = arith.mulf %115, %10 : vector<16x128xf32>
    %122 = arith.mulf %120, %19 : vector<16x128xf32>
    %123 = arith.addf %121, %122 : vector<16x128xf32>
    %124 = vector.extract_strided_slice %1 {offsets = [2, 0], sizes = [1, 128], strides = [1, 1]} : vector<12x128xf32> to vector<1x128xf32>
    %125 = vector.extract_strided_slice %1 {offsets = [1, 0], sizes = [1, 128], strides = [1, 1]} : vector<12x128xf32> to vector<1x128xf32>
    %126 = arith.subf %124, %125 : vector<1x128xf32>
    %cst_4 = arith.constant 1.000000e+00 : f32
    %127 = vector.broadcast %cst_4 : f32 to vector<1x128xf32>
    %128 = arith.divf %127, %126 : vector<1x128xf32>
    %129 = vector.extract_strided_slice %1 {offsets = [3, 0], sizes = [1, 128], strides = [1, 1]} : vector<12x128xf32> to vector<1x128xf32>
    %130 = vector.extract_strided_slice %1 {offsets = [2, 0], sizes = [1, 128], strides = [1, 1]} : vector<12x128xf32> to vector<1x128xf32>
    %131 = arith.subf %129, %130 : vector<1x128xf32>
    %cst_5 = arith.constant 1.000000e+00 : f32
    %132 = vector.broadcast %cst_5 : f32 to vector<1x128xf32>
    %133 = arith.divf %132, %131 : vector<1x128xf32>
    %134 = vector.extract_strided_slice %1 {offsets = [1, 0], sizes = [1, 128], strides = [1, 1]} : vector<12x128xf32> to vector<1x128xf32>
    %135 = vector.broadcast %134 : vector<1x128xf32> to vector<16x128xf32>
    %136 = arith.subf %0, %135 : vector<16x128xf32>
    %137 = vector.broadcast %128 : vector<1x128xf32> to vector<16x128xf32>
    %138 = arith.mulf %136, %137 : vector<16x128xf32>
    %139 = vector.extract_strided_slice %1 {offsets = [3, 0], sizes = [1, 128], strides = [1, 1]} : vector<12x128xf32> to vector<1x128xf32>
    %140 = vector.broadcast %139 : vector<1x128xf32> to vector<16x128xf32>
    %141 = arith.subf %140, %0 : vector<16x128xf32>
    %142 = vector.broadcast %133 : vector<1x128xf32> to vector<16x128xf32>
    %143 = arith.mulf %141, %142 : vector<16x128xf32>
    %144 = arith.mulf %138, %19 : vector<16x128xf32>
    %145 = arith.mulf %143, %28 : vector<16x128xf32>
    %146 = arith.addf %144, %145 : vector<16x128xf32>
    %147 = vector.extract_strided_slice %1 {offsets = [3, 0], sizes = [1, 128], strides = [1, 1]} : vector<12x128xf32> to vector<1x128xf32>
    %148 = vector.extract_strided_slice %1 {offsets = [2, 0], sizes = [1, 128], strides = [1, 1]} : vector<12x128xf32> to vector<1x128xf32>
    %149 = arith.subf %147, %148 : vector<1x128xf32>
    %cst_6 = arith.constant 1.000000e+00 : f32
    %150 = vector.broadcast %cst_6 : f32 to vector<1x128xf32>
    %151 = arith.divf %150, %149 : vector<1x128xf32>
    %152 = vector.extract_strided_slice %1 {offsets = [4, 0], sizes = [1, 128], strides = [1, 1]} : vector<12x128xf32> to vector<1x128xf32>
    %153 = vector.extract_strided_slice %1 {offsets = [3, 0], sizes = [1, 128], strides = [1, 1]} : vector<12x128xf32> to vector<1x128xf32>
    %154 = arith.subf %152, %153 : vector<1x128xf32>
    %cst_7 = arith.constant 1.000000e+00 : f32
    %155 = vector.broadcast %cst_7 : f32 to vector<1x128xf32>
    %156 = arith.divf %155, %154 : vector<1x128xf32>
    %157 = vector.extract_strided_slice %1 {offsets = [2, 0], sizes = [1, 128], strides = [1, 1]} : vector<12x128xf32> to vector<1x128xf32>
    %158 = vector.broadcast %157 : vector<1x128xf32> to vector<16x128xf32>
    %159 = arith.subf %0, %158 : vector<16x128xf32>
    %160 = vector.broadcast %151 : vector<1x128xf32> to vector<16x128xf32>
    %161 = arith.mulf %159, %160 : vector<16x128xf32>
    %162 = vector.extract_strided_slice %1 {offsets = [4, 0], sizes = [1, 128], strides = [1, 1]} : vector<12x128xf32> to vector<1x128xf32>
    %163 = vector.broadcast %162 : vector<1x128xf32> to vector<16x128xf32>
    %164 = arith.subf %163, %0 : vector<16x128xf32>
    %165 = vector.broadcast %156 : vector<1x128xf32> to vector<16x128xf32>
    %166 = arith.mulf %164, %165 : vector<16x128xf32>
    %167 = arith.mulf %161, %28 : vector<16x128xf32>
    %168 = arith.mulf %166, %37 : vector<16x128xf32>
    %169 = arith.addf %167, %168 : vector<16x128xf32>
    %170 = vector.extract_strided_slice %1 {offsets = [4, 0], sizes = [1, 128], strides = [1, 1]} : vector<12x128xf32> to vector<1x128xf32>
    %171 = vector.extract_strided_slice %1 {offsets = [3, 0], sizes = [1, 128], strides = [1, 1]} : vector<12x128xf32> to vector<1x128xf32>
    %172 = arith.subf %170, %171 : vector<1x128xf32>
    %cst_8 = arith.constant 1.000000e+00 : f32
    %173 = vector.broadcast %cst_8 : f32 to vector<1x128xf32>
    %174 = arith.divf %173, %172 : vector<1x128xf32>
    %175 = vector.extract_strided_slice %1 {offsets = [5, 0], sizes = [1, 128], strides = [1, 1]} : vector<12x128xf32> to vector<1x128xf32>
    %176 = vector.extract_strided_slice %1 {offsets = [4, 0], sizes = [1, 128], strides = [1, 1]} : vector<12x128xf32> to vector<1x128xf32>
    %177 = arith.subf %175, %176 : vector<1x128xf32>
    %cst_9 = arith.constant 1.000000e+00 : f32
    %178 = vector.broadcast %cst_9 : f32 to vector<1x128xf32>
    %179 = arith.divf %178, %177 : vector<1x128xf32>
    %180 = vector.extract_strided_slice %1 {offsets = [3, 0], sizes = [1, 128], strides = [1, 1]} : vector<12x128xf32> to vector<1x128xf32>
    %181 = vector.broadcast %180 : vector<1x128xf32> to vector<16x128xf32>
    %182 = arith.subf %0, %181 : vector<16x128xf32>
    %183 = vector.broadcast %174 : vector<1x128xf32> to vector<16x128xf32>
    %184 = arith.mulf %182, %183 : vector<16x128xf32>
    %185 = vector.extract_strided_slice %1 {offsets = [5, 0], sizes = [1, 128], strides = [1, 1]} : vector<12x128xf32> to vector<1x128xf32>
    %186 = vector.broadcast %185 : vector<1x128xf32> to vector<16x128xf32>
    %187 = arith.subf %186, %0 : vector<16x128xf32>
    %188 = vector.broadcast %179 : vector<1x128xf32> to vector<16x128xf32>
    %189 = arith.mulf %187, %188 : vector<16x128xf32>
    %190 = arith.mulf %184, %37 : vector<16x128xf32>
    %191 = arith.mulf %189, %46 : vector<16x128xf32>
    %192 = arith.addf %190, %191 : vector<16x128xf32>
    %193 = vector.extract_strided_slice %1 {offsets = [5, 0], sizes = [1, 128], strides = [1, 1]} : vector<12x128xf32> to vector<1x128xf32>
    %194 = vector.extract_strided_slice %1 {offsets = [4, 0], sizes = [1, 128], strides = [1, 1]} : vector<12x128xf32> to vector<1x128xf32>
    %195 = arith.subf %193, %194 : vector<1x128xf32>
    %cst_10 = arith.constant 1.000000e+00 : f32
    %196 = vector.broadcast %cst_10 : f32 to vector<1x128xf32>
    %197 = arith.divf %196, %195 : vector<1x128xf32>
    %198 = vector.extract_strided_slice %1 {offsets = [6, 0], sizes = [1, 128], strides = [1, 1]} : vector<12x128xf32> to vector<1x128xf32>
    %199 = vector.extract_strided_slice %1 {offsets = [5, 0], sizes = [1, 128], strides = [1, 1]} : vector<12x128xf32> to vector<1x128xf32>
    %200 = arith.subf %198, %199 : vector<1x128xf32>
    %cst_11 = arith.constant 1.000000e+00 : f32
    %201 = vector.broadcast %cst_11 : f32 to vector<1x128xf32>
    %202 = arith.divf %201, %200 : vector<1x128xf32>
    %203 = vector.extract_strided_slice %1 {offsets = [4, 0], sizes = [1, 128], strides = [1, 1]} : vector<12x128xf32> to vector<1x128xf32>
    %204 = vector.broadcast %203 : vector<1x128xf32> to vector<16x128xf32>
    %205 = arith.subf %0, %204 : vector<16x128xf32>
    %206 = vector.broadcast %197 : vector<1x128xf32> to vector<16x128xf32>
    %207 = arith.mulf %205, %206 : vector<16x128xf32>
    %208 = vector.extract_strided_slice %1 {offsets = [6, 0], sizes = [1, 128], strides = [1, 1]} : vector<12x128xf32> to vector<1x128xf32>
    %209 = vector.broadcast %208 : vector<1x128xf32> to vector<16x128xf32>
    %210 = arith.subf %209, %0 : vector<16x128xf32>
    %211 = vector.broadcast %202 : vector<1x128xf32> to vector<16x128xf32>
    %212 = arith.mulf %210, %211 : vector<16x128xf32>
    %213 = arith.mulf %207, %46 : vector<16x128xf32>
    %214 = arith.mulf %212, %55 : vector<16x128xf32>
    %215 = arith.addf %213, %214 : vector<16x128xf32>
    %216 = vector.extract_strided_slice %1 {offsets = [6, 0], sizes = [1, 128], strides = [1, 1]} : vector<12x128xf32> to vector<1x128xf32>
    %217 = vector.extract_strided_slice %1 {offsets = [5, 0], sizes = [1, 128], strides = [1, 1]} : vector<12x128xf32> to vector<1x128xf32>
    %218 = arith.subf %216, %217 : vector<1x128xf32>
    %cst_12 = arith.constant 1.000000e+00 : f32
    %219 = vector.broadcast %cst_12 : f32 to vector<1x128xf32>
    %220 = arith.divf %219, %218 : vector<1x128xf32>
    %221 = vector.extract_strided_slice %1 {offsets = [7, 0], sizes = [1, 128], strides = [1, 1]} : vector<12x128xf32> to vector<1x128xf32>
    %222 = vector.extract_strided_slice %1 {offsets = [6, 0], sizes = [1, 128], strides = [1, 1]} : vector<12x128xf32> to vector<1x128xf32>
    %223 = arith.subf %221, %222 : vector<1x128xf32>
    %cst_13 = arith.constant 1.000000e+00 : f32
    %224 = vector.broadcast %cst_13 : f32 to vector<1x128xf32>
    %225 = arith.divf %224, %223 : vector<1x128xf32>
    %226 = vector.extract_strided_slice %1 {offsets = [5, 0], sizes = [1, 128], strides = [1, 1]} : vector<12x128xf32> to vector<1x128xf32>
    %227 = vector.broadcast %226 : vector<1x128xf32> to vector<16x128xf32>
    %228 = arith.subf %0, %227 : vector<16x128xf32>
    %229 = vector.broadcast %220 : vector<1x128xf32> to vector<16x128xf32>
    %230 = arith.mulf %228, %229 : vector<16x128xf32>
    %231 = vector.extract_strided_slice %1 {offsets = [7, 0], sizes = [1, 128], strides = [1, 1]} : vector<12x128xf32> to vector<1x128xf32>
    %232 = vector.broadcast %231 : vector<1x128xf32> to vector<16x128xf32>
    %233 = arith.subf %232, %0 : vector<16x128xf32>
    %234 = vector.broadcast %225 : vector<1x128xf32> to vector<16x128xf32>
    %235 = arith.mulf %233, %234 : vector<16x128xf32>
    %236 = arith.mulf %230, %55 : vector<16x128xf32>
    %237 = arith.mulf %235, %64 : vector<16x128xf32>
    %238 = arith.addf %236, %237 : vector<16x128xf32>
    %239 = vector.extract_strided_slice %1 {offsets = [7, 0], sizes = [1, 128], strides = [1, 1]} : vector<12x128xf32> to vector<1x128xf32>
    %240 = vector.extract_strided_slice %1 {offsets = [6, 0], sizes = [1, 128], strides = [1, 1]} : vector<12x128xf32> to vector<1x128xf32>
    %241 = arith.subf %239, %240 : vector<1x128xf32>
    %cst_14 = arith.constant 1.000000e+00 : f32
    %242 = vector.broadcast %cst_14 : f32 to vector<1x128xf32>
    %243 = arith.divf %242, %241 : vector<1x128xf32>
    %244 = vector.extract_strided_slice %1 {offsets = [8, 0], sizes = [1, 128], strides = [1, 1]} : vector<12x128xf32> to vector<1x128xf32>
    %245 = vector.extract_strided_slice %1 {offsets = [7, 0], sizes = [1, 128], strides = [1, 1]} : vector<12x128xf32> to vector<1x128xf32>
    %246 = arith.subf %244, %245 : vector<1x128xf32>
    %cst_15 = arith.constant 1.000000e+00 : f32
    %247 = vector.broadcast %cst_15 : f32 to vector<1x128xf32>
    %248 = arith.divf %247, %246 : vector<1x128xf32>
    %249 = vector.extract_strided_slice %1 {offsets = [6, 0], sizes = [1, 128], strides = [1, 1]} : vector<12x128xf32> to vector<1x128xf32>
    %250 = vector.broadcast %249 : vector<1x128xf32> to vector<16x128xf32>
    %251 = arith.subf %0, %250 : vector<16x128xf32>
    %252 = vector.broadcast %243 : vector<1x128xf32> to vector<16x128xf32>
    %253 = arith.mulf %251, %252 : vector<16x128xf32>
    %254 = vector.extract_strided_slice %1 {offsets = [8, 0], sizes = [1, 128], strides = [1, 1]} : vector<12x128xf32> to vector<1x128xf32>
    %255 = vector.broadcast %254 : vector<1x128xf32> to vector<16x128xf32>
    %256 = arith.subf %255, %0 : vector<16x128xf32>
    %257 = vector.broadcast %248 : vector<1x128xf32> to vector<16x128xf32>
    %258 = arith.mulf %256, %257 : vector<16x128xf32>
    %259 = arith.mulf %253, %64 : vector<16x128xf32>
    %260 = arith.mulf %258, %73 : vector<16x128xf32>
    %261 = arith.addf %259, %260 : vector<16x128xf32>
    %262 = vector.extract_strided_slice %1 {offsets = [8, 0], sizes = [1, 128], strides = [1, 1]} : vector<12x128xf32> to vector<1x128xf32>
    %263 = vector.extract_strided_slice %1 {offsets = [7, 0], sizes = [1, 128], strides = [1, 1]} : vector<12x128xf32> to vector<1x128xf32>
    %264 = arith.subf %262, %263 : vector<1x128xf32>
    %cst_16 = arith.constant 1.000000e+00 : f32
    %265 = vector.broadcast %cst_16 : f32 to vector<1x128xf32>
    %266 = arith.divf %265, %264 : vector<1x128xf32>
    %267 = vector.extract_strided_slice %1 {offsets = [9, 0], sizes = [1, 128], strides = [1, 1]} : vector<12x128xf32> to vector<1x128xf32>
    %268 = vector.extract_strided_slice %1 {offsets = [8, 0], sizes = [1, 128], strides = [1, 1]} : vector<12x128xf32> to vector<1x128xf32>
    %269 = arith.subf %267, %268 : vector<1x128xf32>
    %cst_17 = arith.constant 1.000000e+00 : f32
    %270 = vector.broadcast %cst_17 : f32 to vector<1x128xf32>
    %271 = arith.divf %270, %269 : vector<1x128xf32>
    %272 = vector.extract_strided_slice %1 {offsets = [7, 0], sizes = [1, 128], strides = [1, 1]} : vector<12x128xf32> to vector<1x128xf32>
    %273 = vector.broadcast %272 : vector<1x128xf32> to vector<16x128xf32>
    %274 = arith.subf %0, %273 : vector<16x128xf32>
    %275 = vector.broadcast %266 : vector<1x128xf32> to vector<16x128xf32>
    %276 = arith.mulf %274, %275 : vector<16x128xf32>
    %277 = vector.extract_strided_slice %1 {offsets = [9, 0], sizes = [1, 128], strides = [1, 1]} : vector<12x128xf32> to vector<1x128xf32>
    %278 = vector.broadcast %277 : vector<1x128xf32> to vector<16x128xf32>
    %279 = arith.subf %278, %0 : vector<16x128xf32>
    %280 = vector.broadcast %271 : vector<1x128xf32> to vector<16x128xf32>
    %281 = arith.mulf %279, %280 : vector<16x128xf32>
    %282 = arith.mulf %276, %73 : vector<16x128xf32>
    %283 = arith.mulf %281, %82 : vector<16x128xf32>
    %284 = arith.addf %282, %283 : vector<16x128xf32>
    %285 = vector.extract_strided_slice %1 {offsets = [9, 0], sizes = [1, 128], strides = [1, 1]} : vector<12x128xf32> to vector<1x128xf32>
    %286 = vector.extract_strided_slice %1 {offsets = [8, 0], sizes = [1, 128], strides = [1, 1]} : vector<12x128xf32> to vector<1x128xf32>
    %287 = arith.subf %285, %286 : vector<1x128xf32>
    %cst_18 = arith.constant 1.000000e+00 : f32
    %288 = vector.broadcast %cst_18 : f32 to vector<1x128xf32>
    %289 = arith.divf %288, %287 : vector<1x128xf32>
    %290 = vector.extract_strided_slice %1 {offsets = [10, 0], sizes = [1, 128], strides = [1, 1]} : vector<12x128xf32> to vector<1x128xf32>
    %291 = vector.extract_strided_slice %1 {offsets = [9, 0], sizes = [1, 128], strides = [1, 1]} : vector<12x128xf32> to vector<1x128xf32>
    %292 = arith.subf %290, %291 : vector<1x128xf32>
    %cst_19 = arith.constant 1.000000e+00 : f32
    %293 = vector.broadcast %cst_19 : f32 to vector<1x128xf32>
    %294 = arith.divf %293, %292 : vector<1x128xf32>
    %295 = vector.extract_strided_slice %1 {offsets = [8, 0], sizes = [1, 128], strides = [1, 1]} : vector<12x128xf32> to vector<1x128xf32>
    %296 = vector.broadcast %295 : vector<1x128xf32> to vector<16x128xf32>
    %297 = arith.subf %0, %296 : vector<16x128xf32>
    %298 = vector.broadcast %289 : vector<1x128xf32> to vector<16x128xf32>
    %299 = arith.mulf %297, %298 : vector<16x128xf32>
    %300 = vector.extract_strided_slice %1 {offsets = [10, 0], sizes = [1, 128], strides = [1, 1]} : vector<12x128xf32> to vector<1x128xf32>
    %301 = vector.broadcast %300 : vector<1x128xf32> to vector<16x128xf32>
    %302 = arith.subf %301, %0 : vector<16x128xf32>
    %303 = vector.broadcast %294 : vector<1x128xf32> to vector<16x128xf32>
    %304 = arith.mulf %302, %303 : vector<16x128xf32>
    %305 = arith.mulf %299, %82 : vector<16x128xf32>
    %306 = arith.mulf %304, %91 : vector<16x128xf32>
    %307 = arith.addf %305, %306 : vector<16x128xf32>
    %308 = vector.extract_strided_slice %1 {offsets = [10, 0], sizes = [1, 128], strides = [1, 1]} : vector<12x128xf32> to vector<1x128xf32>
    %309 = vector.extract_strided_slice %1 {offsets = [9, 0], sizes = [1, 128], strides = [1, 1]} : vector<12x128xf32> to vector<1x128xf32>
    %310 = arith.subf %308, %309 : vector<1x128xf32>
    %cst_20 = arith.constant 1.000000e+00 : f32
    %311 = vector.broadcast %cst_20 : f32 to vector<1x128xf32>
    %312 = arith.divf %311, %310 : vector<1x128xf32>
    %313 = vector.extract_strided_slice %1 {offsets = [11, 0], sizes = [1, 128], strides = [1, 1]} : vector<12x128xf32> to vector<1x128xf32>
    %314 = vector.extract_strided_slice %1 {offsets = [10, 0], sizes = [1, 128], strides = [1, 1]} : vector<12x128xf32> to vector<1x128xf32>
    %315 = arith.subf %313, %314 : vector<1x128xf32>
    %cst_21 = arith.constant 1.000000e+00 : f32
    %316 = vector.broadcast %cst_21 : f32 to vector<1x128xf32>
    %317 = arith.divf %316, %315 : vector<1x128xf32>
    %318 = vector.extract_strided_slice %1 {offsets = [9, 0], sizes = [1, 128], strides = [1, 1]} : vector<12x128xf32> to vector<1x128xf32>
    %319 = vector.broadcast %318 : vector<1x128xf32> to vector<16x128xf32>
    %320 = arith.subf %0, %319 : vector<16x128xf32>
    %321 = vector.broadcast %312 : vector<1x128xf32> to vector<16x128xf32>
    %322 = arith.mulf %320, %321 : vector<16x128xf32>
    %323 = vector.extract_strided_slice %1 {offsets = [11, 0], sizes = [1, 128], strides = [1, 1]} : vector<12x128xf32> to vector<1x128xf32>
    %324 = vector.broadcast %323 : vector<1x128xf32> to vector<16x128xf32>
    %325 = arith.subf %324, %0 : vector<16x128xf32>
    %326 = vector.broadcast %317 : vector<1x128xf32> to vector<16x128xf32>
    %327 = arith.mulf %325, %326 : vector<16x128xf32>
    %328 = arith.mulf %322, %91 : vector<16x128xf32>
    %329 = arith.mulf %327, %100 : vector<16x128xf32>
    %330 = arith.addf %328, %329 : vector<16x128xf32>
    %331 = vector.extract_strided_slice %1 {offsets = [2, 0], sizes = [1, 128], strides = [1, 1]} : vector<12x128xf32> to vector<1x128xf32>
    %332 = vector.extract_strided_slice %1 {offsets = [0, 0], sizes = [1, 128], strides = [1, 1]} : vector<12x128xf32> to vector<1x128xf32>
    %333 = arith.subf %331, %332 : vector<1x128xf32>
    %cst_22 = arith.constant 1.000000e+00 : f32
    %334 = vector.broadcast %cst_22 : f32 to vector<1x128xf32>
    %335 = arith.divf %334, %333 : vector<1x128xf32>
    %336 = vector.extract_strided_slice %1 {offsets = [3, 0], sizes = [1, 128], strides = [1, 1]} : vector<12x128xf32> to vector<1x128xf32>
    %337 = vector.extract_strided_slice %1 {offsets = [1, 0], sizes = [1, 128], strides = [1, 1]} : vector<12x128xf32> to vector<1x128xf32>
    %338 = arith.subf %336, %337 : vector<1x128xf32>
    %cst_23 = arith.constant 1.000000e+00 : f32
    %339 = vector.broadcast %cst_23 : f32 to vector<1x128xf32>
    %340 = arith.divf %339, %338 : vector<1x128xf32>
    %341 = vector.extract_strided_slice %1 {offsets = [0, 0], sizes = [1, 128], strides = [1, 1]} : vector<12x128xf32> to vector<1x128xf32>
    %342 = vector.broadcast %341 : vector<1x128xf32> to vector<16x128xf32>
    %343 = arith.subf %0, %342 : vector<16x128xf32>
    %344 = vector.broadcast %335 : vector<1x128xf32> to vector<16x128xf32>
    %345 = arith.mulf %343, %344 : vector<16x128xf32>
    %346 = vector.extract_strided_slice %1 {offsets = [3, 0], sizes = [1, 128], strides = [1, 1]} : vector<12x128xf32> to vector<1x128xf32>
    %347 = vector.broadcast %346 : vector<1x128xf32> to vector<16x128xf32>
    %348 = arith.subf %347, %0 : vector<16x128xf32>
    %349 = vector.broadcast %340 : vector<1x128xf32> to vector<16x128xf32>
    %350 = arith.mulf %348, %349 : vector<16x128xf32>
    %351 = arith.mulf %345, %123 : vector<16x128xf32>
    %352 = arith.mulf %350, %146 : vector<16x128xf32>
    %353 = arith.addf %351, %352 : vector<16x128xf32>
    %354 = vector.extract_strided_slice %1 {offsets = [3, 0], sizes = [1, 128], strides = [1, 1]} : vector<12x128xf32> to vector<1x128xf32>
    %355 = vector.extract_strided_slice %1 {offsets = [1, 0], sizes = [1, 128], strides = [1, 1]} : vector<12x128xf32> to vector<1x128xf32>
    %356 = arith.subf %354, %355 : vector<1x128xf32>
    %cst_24 = arith.constant 1.000000e+00 : f32
    %357 = vector.broadcast %cst_24 : f32 to vector<1x128xf32>
    %358 = arith.divf %357, %356 : vector<1x128xf32>
    %359 = vector.extract_strided_slice %1 {offsets = [4, 0], sizes = [1, 128], strides = [1, 1]} : vector<12x128xf32> to vector<1x128xf32>
    %360 = vector.extract_strided_slice %1 {offsets = [2, 0], sizes = [1, 128], strides = [1, 1]} : vector<12x128xf32> to vector<1x128xf32>
    %361 = arith.subf %359, %360 : vector<1x128xf32>
    %cst_25 = arith.constant 1.000000e+00 : f32
    %362 = vector.broadcast %cst_25 : f32 to vector<1x128xf32>
    %363 = arith.divf %362, %361 : vector<1x128xf32>
    %364 = vector.extract_strided_slice %1 {offsets = [1, 0], sizes = [1, 128], strides = [1, 1]} : vector<12x128xf32> to vector<1x128xf32>
    %365 = vector.broadcast %364 : vector<1x128xf32> to vector<16x128xf32>
    %366 = arith.subf %0, %365 : vector<16x128xf32>
    %367 = vector.broadcast %358 : vector<1x128xf32> to vector<16x128xf32>
    %368 = arith.mulf %366, %367 : vector<16x128xf32>
    %369 = vector.extract_strided_slice %1 {offsets = [4, 0], sizes = [1, 128], strides = [1, 1]} : vector<12x128xf32> to vector<1x128xf32>
    %370 = vector.broadcast %369 : vector<1x128xf32> to vector<16x128xf32>
    %371 = arith.subf %370, %0 : vector<16x128xf32>
    %372 = vector.broadcast %363 : vector<1x128xf32> to vector<16x128xf32>
    %373 = arith.mulf %371, %372 : vector<16x128xf32>
    %374 = arith.mulf %368, %146 : vector<16x128xf32>
    %375 = arith.mulf %373, %169 : vector<16x128xf32>
    %376 = arith.addf %374, %375 : vector<16x128xf32>
    %377 = vector.extract_strided_slice %1 {offsets = [4, 0], sizes = [1, 128], strides = [1, 1]} : vector<12x128xf32> to vector<1x128xf32>
    %378 = vector.extract_strided_slice %1 {offsets = [2, 0], sizes = [1, 128], strides = [1, 1]} : vector<12x128xf32> to vector<1x128xf32>
    %379 = arith.subf %377, %378 : vector<1x128xf32>
    %cst_26 = arith.constant 1.000000e+00 : f32
    %380 = vector.broadcast %cst_26 : f32 to vector<1x128xf32>
    %381 = arith.divf %380, %379 : vector<1x128xf32>
    %382 = vector.extract_strided_slice %1 {offsets = [5, 0], sizes = [1, 128], strides = [1, 1]} : vector<12x128xf32> to vector<1x128xf32>
    %383 = vector.extract_strided_slice %1 {offsets = [3, 0], sizes = [1, 128], strides = [1, 1]} : vector<12x128xf32> to vector<1x128xf32>
    %384 = arith.subf %382, %383 : vector<1x128xf32>
    %cst_27 = arith.constant 1.000000e+00 : f32
    %385 = vector.broadcast %cst_27 : f32 to vector<1x128xf32>
    %386 = arith.divf %385, %384 : vector<1x128xf32>
    %387 = vector.extract_strided_slice %1 {offsets = [2, 0], sizes = [1, 128], strides = [1, 1]} : vector<12x128xf32> to vector<1x128xf32>
    %388 = vector.broadcast %387 : vector<1x128xf32> to vector<16x128xf32>
    %389 = arith.subf %0, %388 : vector<16x128xf32>
    %390 = vector.broadcast %381 : vector<1x128xf32> to vector<16x128xf32>
    %391 = arith.mulf %389, %390 : vector<16x128xf32>
    %392 = vector.extract_strided_slice %1 {offsets = [5, 0], sizes = [1, 128], strides = [1, 1]} : vector<12x128xf32> to vector<1x128xf32>
    %393 = vector.broadcast %392 : vector<1x128xf32> to vector<16x128xf32>
    %394 = arith.subf %393, %0 : vector<16x128xf32>
    %395 = vector.broadcast %386 : vector<1x128xf32> to vector<16x128xf32>
    %396 = arith.mulf %394, %395 : vector<16x128xf32>
    %397 = arith.mulf %391, %169 : vector<16x128xf32>
    %398 = arith.mulf %396, %192 : vector<16x128xf32>
    %399 = arith.addf %397, %398 : vector<16x128xf32>
    %400 = vector.extract_strided_slice %1 {offsets = [5, 0], sizes = [1, 128], strides = [1, 1]} : vector<12x128xf32> to vector<1x128xf32>
    %401 = vector.extract_strided_slice %1 {offsets = [3, 0], sizes = [1, 128], strides = [1, 1]} : vector<12x128xf32> to vector<1x128xf32>
    %402 = arith.subf %400, %401 : vector<1x128xf32>
    %cst_28 = arith.constant 1.000000e+00 : f32
    %403 = vector.broadcast %cst_28 : f32 to vector<1x128xf32>
    %404 = arith.divf %403, %402 : vector<1x128xf32>
    %405 = vector.extract_strided_slice %1 {offsets = [6, 0], sizes = [1, 128], strides = [1, 1]} : vector<12x128xf32> to vector<1x128xf32>
    %406 = vector.extract_strided_slice %1 {offsets = [4, 0], sizes = [1, 128], strides = [1, 1]} : vector<12x128xf32> to vector<1x128xf32>
    %407 = arith.subf %405, %406 : vector<1x128xf32>
    %cst_29 = arith.constant 1.000000e+00 : f32
    %408 = vector.broadcast %cst_29 : f32 to vector<1x128xf32>
    %409 = arith.divf %408, %407 : vector<1x128xf32>
    %410 = vector.extract_strided_slice %1 {offsets = [3, 0], sizes = [1, 128], strides = [1, 1]} : vector<12x128xf32> to vector<1x128xf32>
    %411 = vector.broadcast %410 : vector<1x128xf32> to vector<16x128xf32>
    %412 = arith.subf %0, %411 : vector<16x128xf32>
    %413 = vector.broadcast %404 : vector<1x128xf32> to vector<16x128xf32>
    %414 = arith.mulf %412, %413 : vector<16x128xf32>
    %415 = vector.extract_strided_slice %1 {offsets = [6, 0], sizes = [1, 128], strides = [1, 1]} : vector<12x128xf32> to vector<1x128xf32>
    %416 = vector.broadcast %415 : vector<1x128xf32> to vector<16x128xf32>
    %417 = arith.subf %416, %0 : vector<16x128xf32>
    %418 = vector.broadcast %409 : vector<1x128xf32> to vector<16x128xf32>
    %419 = arith.mulf %417, %418 : vector<16x128xf32>
    %420 = arith.mulf %414, %192 : vector<16x128xf32>
    %421 = arith.mulf %419, %215 : vector<16x128xf32>
    %422 = arith.addf %420, %421 : vector<16x128xf32>
    %423 = vector.extract_strided_slice %1 {offsets = [6, 0], sizes = [1, 128], strides = [1, 1]} : vector<12x128xf32> to vector<1x128xf32>
    %424 = vector.extract_strided_slice %1 {offsets = [4, 0], sizes = [1, 128], strides = [1, 1]} : vector<12x128xf32> to vector<1x128xf32>
    %425 = arith.subf %423, %424 : vector<1x128xf32>
    %cst_30 = arith.constant 1.000000e+00 : f32
    %426 = vector.broadcast %cst_30 : f32 to vector<1x128xf32>
    %427 = arith.divf %426, %425 : vector<1x128xf32>
    %428 = vector.extract_strided_slice %1 {offsets = [7, 0], sizes = [1, 128], strides = [1, 1]} : vector<12x128xf32> to vector<1x128xf32>
    %429 = vector.extract_strided_slice %1 {offsets = [5, 0], sizes = [1, 128], strides = [1, 1]} : vector<12x128xf32> to vector<1x128xf32>
    %430 = arith.subf %428, %429 : vector<1x128xf32>
    %cst_31 = arith.constant 1.000000e+00 : f32
    %431 = vector.broadcast %cst_31 : f32 to vector<1x128xf32>
    %432 = arith.divf %431, %430 : vector<1x128xf32>
    %433 = vector.extract_strided_slice %1 {offsets = [4, 0], sizes = [1, 128], strides = [1, 1]} : vector<12x128xf32> to vector<1x128xf32>
    %434 = vector.broadcast %433 : vector<1x128xf32> to vector<16x128xf32>
    %435 = arith.subf %0, %434 : vector<16x128xf32>
    %436 = vector.broadcast %427 : vector<1x128xf32> to vector<16x128xf32>
    %437 = arith.mulf %435, %436 : vector<16x128xf32>
    %438 = vector.extract_strided_slice %1 {offsets = [7, 0], sizes = [1, 128], strides = [1, 1]} : vector<12x128xf32> to vector<1x128xf32>
    %439 = vector.broadcast %438 : vector<1x128xf32> to vector<16x128xf32>
    %440 = arith.subf %439, %0 : vector<16x128xf32>
    %441 = vector.broadcast %432 : vector<1x128xf32> to vector<16x128xf32>
    %442 = arith.mulf %440, %441 : vector<16x128xf32>
    %443 = arith.mulf %437, %215 : vector<16x128xf32>
    %444 = arith.mulf %442, %238 : vector<16x128xf32>
    %445 = arith.addf %443, %444 : vector<16x128xf32>
    %446 = vector.extract_strided_slice %1 {offsets = [7, 0], sizes = [1, 128], strides = [1, 1]} : vector<12x128xf32> to vector<1x128xf32>
    %447 = vector.extract_strided_slice %1 {offsets = [5, 0], sizes = [1, 128], strides = [1, 1]} : vector<12x128xf32> to vector<1x128xf32>
    %448 = arith.subf %446, %447 : vector<1x128xf32>
    %cst_32 = arith.constant 1.000000e+00 : f32
    %449 = vector.broadcast %cst_32 : f32 to vector<1x128xf32>
    %450 = arith.divf %449, %448 : vector<1x128xf32>
    %451 = vector.extract_strided_slice %1 {offsets = [8, 0], sizes = [1, 128], strides = [1, 1]} : vector<12x128xf32> to vector<1x128xf32>
    %452 = vector.extract_strided_slice %1 {offsets = [6, 0], sizes = [1, 128], strides = [1, 1]} : vector<12x128xf32> to vector<1x128xf32>
    %453 = arith.subf %451, %452 : vector<1x128xf32>
    %cst_33 = arith.constant 1.000000e+00 : f32
    %454 = vector.broadcast %cst_33 : f32 to vector<1x128xf32>
    %455 = arith.divf %454, %453 : vector<1x128xf32>
    %456 = vector.extract_strided_slice %1 {offsets = [5, 0], sizes = [1, 128], strides = [1, 1]} : vector<12x128xf32> to vector<1x128xf32>
    %457 = vector.broadcast %456 : vector<1x128xf32> to vector<16x128xf32>
    %458 = arith.subf %0, %457 : vector<16x128xf32>
    %459 = vector.broadcast %450 : vector<1x128xf32> to vector<16x128xf32>
    %460 = arith.mulf %458, %459 : vector<16x128xf32>
    %461 = vector.extract_strided_slice %1 {offsets = [8, 0], sizes = [1, 128], strides = [1, 1]} : vector<12x128xf32> to vector<1x128xf32>
    %462 = vector.broadcast %461 : vector<1x128xf32> to vector<16x128xf32>
    %463 = arith.subf %462, %0 : vector<16x128xf32>
    %464 = vector.broadcast %455 : vector<1x128xf32> to vector<16x128xf32>
    %465 = arith.mulf %463, %464 : vector<16x128xf32>
    %466 = arith.mulf %460, %238 : vector<16x128xf32>
    %467 = arith.mulf %465, %261 : vector<16x128xf32>
    %468 = arith.addf %466, %467 : vector<16x128xf32>
    %469 = vector.extract_strided_slice %1 {offsets = [8, 0], sizes = [1, 128], strides = [1, 1]} : vector<12x128xf32> to vector<1x128xf32>
    %470 = vector.extract_strided_slice %1 {offsets = [6, 0], sizes = [1, 128], strides = [1, 1]} : vector<12x128xf32> to vector<1x128xf32>
    %471 = arith.subf %469, %470 : vector<1x128xf32>
    %cst_34 = arith.constant 1.000000e+00 : f32
    %472 = vector.broadcast %cst_34 : f32 to vector<1x128xf32>
    %473 = arith.divf %472, %471 : vector<1x128xf32>
    %474 = vector.extract_strided_slice %1 {offsets = [9, 0], sizes = [1, 128], strides = [1, 1]} : vector<12x128xf32> to vector<1x128xf32>
    %475 = vector.extract_strided_slice %1 {offsets = [7, 0], sizes = [1, 128], strides = [1, 1]} : vector<12x128xf32> to vector<1x128xf32>
    %476 = arith.subf %474, %475 : vector<1x128xf32>
    %cst_35 = arith.constant 1.000000e+00 : f32
    %477 = vector.broadcast %cst_35 : f32 to vector<1x128xf32>
    %478 = arith.divf %477, %476 : vector<1x128xf32>
    %479 = vector.extract_strided_slice %1 {offsets = [6, 0], sizes = [1, 128], strides = [1, 1]} : vector<12x128xf32> to vector<1x128xf32>
    %480 = vector.broadcast %479 : vector<1x128xf32> to vector<16x128xf32>
    %481 = arith.subf %0, %480 : vector<16x128xf32>
    %482 = vector.broadcast %473 : vector<1x128xf32> to vector<16x128xf32>
    %483 = arith.mulf %481, %482 : vector<16x128xf32>
    %484 = vector.extract_strided_slice %1 {offsets = [9, 0], sizes = [1, 128], strides = [1, 1]} : vector<12x128xf32> to vector<1x128xf32>
    %485 = vector.broadcast %484 : vector<1x128xf32> to vector<16x128xf32>
    %486 = arith.subf %485, %0 : vector<16x128xf32>
    %487 = vector.broadcast %478 : vector<1x128xf32> to vector<16x128xf32>
    %488 = arith.mulf %486, %487 : vector<16x128xf32>
    %489 = arith.mulf %483, %261 : vector<16x128xf32>
    %490 = arith.mulf %488, %284 : vector<16x128xf32>
    %491 = arith.addf %489, %490 : vector<16x128xf32>
    %492 = vector.extract_strided_slice %1 {offsets = [9, 0], sizes = [1, 128], strides = [1, 1]} : vector<12x128xf32> to vector<1x128xf32>
    %493 = vector.extract_strided_slice %1 {offsets = [7, 0], sizes = [1, 128], strides = [1, 1]} : vector<12x128xf32> to vector<1x128xf32>
    %494 = arith.subf %492, %493 : vector<1x128xf32>
    %cst_36 = arith.constant 1.000000e+00 : f32
    %495 = vector.broadcast %cst_36 : f32 to vector<1x128xf32>
    %496 = arith.divf %495, %494 : vector<1x128xf32>
    %497 = vector.extract_strided_slice %1 {offsets = [10, 0], sizes = [1, 128], strides = [1, 1]} : vector<12x128xf32> to vector<1x128xf32>
    %498 = vector.extract_strided_slice %1 {offsets = [8, 0], sizes = [1, 128], strides = [1, 1]} : vector<12x128xf32> to vector<1x128xf32>
    %499 = arith.subf %497, %498 : vector<1x128xf32>
    %cst_37 = arith.constant 1.000000e+00 : f32
    %500 = vector.broadcast %cst_37 : f32 to vector<1x128xf32>
    %501 = arith.divf %500, %499 : vector<1x128xf32>
    %502 = vector.extract_strided_slice %1 {offsets = [7, 0], sizes = [1, 128], strides = [1, 1]} : vector<12x128xf32> to vector<1x128xf32>
    %503 = vector.broadcast %502 : vector<1x128xf32> to vector<16x128xf32>
    %504 = arith.subf %0, %503 : vector<16x128xf32>
    %505 = vector.broadcast %496 : vector<1x128xf32> to vector<16x128xf32>
    %506 = arith.mulf %504, %505 : vector<16x128xf32>
    %507 = vector.extract_strided_slice %1 {offsets = [10, 0], sizes = [1, 128], strides = [1, 1]} : vector<12x128xf32> to vector<1x128xf32>
    %508 = vector.broadcast %507 : vector<1x128xf32> to vector<16x128xf32>
    %509 = arith.subf %508, %0 : vector<16x128xf32>
    %510 = vector.broadcast %501 : vector<1x128xf32> to vector<16x128xf32>
    %511 = arith.mulf %509, %510 : vector<16x128xf32>
    %512 = arith.mulf %506, %284 : vector<16x128xf32>
    %513 = arith.mulf %511, %307 : vector<16x128xf32>
    %514 = arith.addf %512, %513 : vector<16x128xf32>
    %515 = vector.extract_strided_slice %1 {offsets = [10, 0], sizes = [1, 128], strides = [1, 1]} : vector<12x128xf32> to vector<1x128xf32>
    %516 = vector.extract_strided_slice %1 {offsets = [8, 0], sizes = [1, 128], strides = [1, 1]} : vector<12x128xf32> to vector<1x128xf32>
    %517 = arith.subf %515, %516 : vector<1x128xf32>
    %cst_38 = arith.constant 1.000000e+00 : f32
    %518 = vector.broadcast %cst_38 : f32 to vector<1x128xf32>
    %519 = arith.divf %518, %517 : vector<1x128xf32>
    %520 = vector.extract_strided_slice %1 {offsets = [11, 0], sizes = [1, 128], strides = [1, 1]} : vector<12x128xf32> to vector<1x128xf32>
    %521 = vector.extract_strided_slice %1 {offsets = [9, 0], sizes = [1, 128], strides = [1, 1]} : vector<12x128xf32> to vector<1x128xf32>
    %522 = arith.subf %520, %521 : vector<1x128xf32>
    %cst_39 = arith.constant 1.000000e+00 : f32
    %523 = vector.broadcast %cst_39 : f32 to vector<1x128xf32>
    %524 = arith.divf %523, %522 : vector<1x128xf32>
    %525 = vector.extract_strided_slice %1 {offsets = [8, 0], sizes = [1, 128], strides = [1, 1]} : vector<12x128xf32> to vector<1x128xf32>
    %526 = vector.broadcast %525 : vector<1x128xf32> to vector<16x128xf32>
    %527 = arith.subf %0, %526 : vector<16x128xf32>
    %528 = vector.broadcast %519 : vector<1x128xf32> to vector<16x128xf32>
    %529 = arith.mulf %527, %528 : vector<16x128xf32>
    %530 = vector.extract_strided_slice %1 {offsets = [11, 0], sizes = [1, 128], strides = [1, 1]} : vector<12x128xf32> to vector<1x128xf32>
    %531 = vector.broadcast %530 : vector<1x128xf32> to vector<16x128xf32>
    %532 = arith.subf %531, %0 : vector<16x128xf32>
    %533 = vector.broadcast %524 : vector<1x128xf32> to vector<16x128xf32>
    %534 = arith.mulf %532, %533 : vector<16x128xf32>
    %535 = arith.mulf %529, %307 : vector<16x128xf32>
    %536 = arith.mulf %534, %330 : vector<16x128xf32>
    %537 = arith.addf %535, %536 : vector<16x128xf32>
    %538 = vector.extract_strided_slice %1 {offsets = [3, 0], sizes = [1, 128], strides = [1, 1]} : vector<12x128xf32> to vector<1x128xf32>
    %539 = vector.extract_strided_slice %1 {offsets = [0, 0], sizes = [1, 128], strides = [1, 1]} : vector<12x128xf32> to vector<1x128xf32>
    %540 = arith.subf %538, %539 : vector<1x128xf32>
    %cst_40 = arith.constant 1.000000e+00 : f32
    %541 = vector.broadcast %cst_40 : f32 to vector<1x128xf32>
    %542 = arith.divf %541, %540 : vector<1x128xf32>
    %543 = vector.extract_strided_slice %1 {offsets = [4, 0], sizes = [1, 128], strides = [1, 1]} : vector<12x128xf32> to vector<1x128xf32>
    %544 = vector.extract_strided_slice %1 {offsets = [1, 0], sizes = [1, 128], strides = [1, 1]} : vector<12x128xf32> to vector<1x128xf32>
    %545 = arith.subf %543, %544 : vector<1x128xf32>
    %cst_41 = arith.constant 1.000000e+00 : f32
    %546 = vector.broadcast %cst_41 : f32 to vector<1x128xf32>
    %547 = arith.divf %546, %545 : vector<1x128xf32>
    %548 = vector.extract_strided_slice %1 {offsets = [0, 0], sizes = [1, 128], strides = [1, 1]} : vector<12x128xf32> to vector<1x128xf32>
    %549 = vector.broadcast %548 : vector<1x128xf32> to vector<16x128xf32>
    %550 = arith.subf %0, %549 : vector<16x128xf32>
    %551 = vector.broadcast %542 : vector<1x128xf32> to vector<16x128xf32>
    %552 = arith.mulf %550, %551 : vector<16x128xf32>
    %553 = vector.extract_strided_slice %1 {offsets = [4, 0], sizes = [1, 128], strides = [1, 1]} : vector<12x128xf32> to vector<1x128xf32>
    %554 = vector.broadcast %553 : vector<1x128xf32> to vector<16x128xf32>
    %555 = arith.subf %554, %0 : vector<16x128xf32>
    %556 = vector.broadcast %547 : vector<1x128xf32> to vector<16x128xf32>
    %557 = arith.mulf %555, %556 : vector<16x128xf32>
    %558 = arith.mulf %552, %353 : vector<16x128xf32>
    %559 = arith.mulf %557, %376 : vector<16x128xf32>
    %560 = arith.addf %558, %559 : vector<16x128xf32>
    %561 = vector.extract_strided_slice %1 {offsets = [4, 0], sizes = [1, 128], strides = [1, 1]} : vector<12x128xf32> to vector<1x128xf32>
    %562 = vector.extract_strided_slice %1 {offsets = [1, 0], sizes = [1, 128], strides = [1, 1]} : vector<12x128xf32> to vector<1x128xf32>
    %563 = arith.subf %561, %562 : vector<1x128xf32>
    %cst_42 = arith.constant 1.000000e+00 : f32
    %564 = vector.broadcast %cst_42 : f32 to vector<1x128xf32>
    %565 = arith.divf %564, %563 : vector<1x128xf32>
    %566 = vector.extract_strided_slice %1 {offsets = [5, 0], sizes = [1, 128], strides = [1, 1]} : vector<12x128xf32> to vector<1x128xf32>
    %567 = vector.extract_strided_slice %1 {offsets = [2, 0], sizes = [1, 128], strides = [1, 1]} : vector<12x128xf32> to vector<1x128xf32>
    %568 = arith.subf %566, %567 : vector<1x128xf32>
    %cst_43 = arith.constant 1.000000e+00 : f32
    %569 = vector.broadcast %cst_43 : f32 to vector<1x128xf32>
    %570 = arith.divf %569, %568 : vector<1x128xf32>
    %571 = vector.extract_strided_slice %1 {offsets = [1, 0], sizes = [1, 128], strides = [1, 1]} : vector<12x128xf32> to vector<1x128xf32>
    %572 = vector.broadcast %571 : vector<1x128xf32> to vector<16x128xf32>
    %573 = arith.subf %0, %572 : vector<16x128xf32>
    %574 = vector.broadcast %565 : vector<1x128xf32> to vector<16x128xf32>
    %575 = arith.mulf %573, %574 : vector<16x128xf32>
    %576 = vector.extract_strided_slice %1 {offsets = [5, 0], sizes = [1, 128], strides = [1, 1]} : vector<12x128xf32> to vector<1x128xf32>
    %577 = vector.broadcast %576 : vector<1x128xf32> to vector<16x128xf32>
    %578 = arith.subf %577, %0 : vector<16x128xf32>
    %579 = vector.broadcast %570 : vector<1x128xf32> to vector<16x128xf32>
    %580 = arith.mulf %578, %579 : vector<16x128xf32>
    %581 = arith.mulf %575, %376 : vector<16x128xf32>
    %582 = arith.mulf %580, %399 : vector<16x128xf32>
    %583 = arith.addf %581, %582 : vector<16x128xf32>
    %584 = vector.extract_strided_slice %1 {offsets = [5, 0], sizes = [1, 128], strides = [1, 1]} : vector<12x128xf32> to vector<1x128xf32>
    %585 = vector.extract_strided_slice %1 {offsets = [2, 0], sizes = [1, 128], strides = [1, 1]} : vector<12x128xf32> to vector<1x128xf32>
    %586 = arith.subf %584, %585 : vector<1x128xf32>
    %cst_44 = arith.constant 1.000000e+00 : f32
    %587 = vector.broadcast %cst_44 : f32 to vector<1x128xf32>
    %588 = arith.divf %587, %586 : vector<1x128xf32>
    %589 = vector.extract_strided_slice %1 {offsets = [6, 0], sizes = [1, 128], strides = [1, 1]} : vector<12x128xf32> to vector<1x128xf32>
    %590 = vector.extract_strided_slice %1 {offsets = [3, 0], sizes = [1, 128], strides = [1, 1]} : vector<12x128xf32> to vector<1x128xf32>
    %591 = arith.subf %589, %590 : vector<1x128xf32>
    %cst_45 = arith.constant 1.000000e+00 : f32
    %592 = vector.broadcast %cst_45 : f32 to vector<1x128xf32>
    %593 = arith.divf %592, %591 : vector<1x128xf32>
    %594 = vector.extract_strided_slice %1 {offsets = [2, 0], sizes = [1, 128], strides = [1, 1]} : vector<12x128xf32> to vector<1x128xf32>
    %595 = vector.broadcast %594 : vector<1x128xf32> to vector<16x128xf32>
    %596 = arith.subf %0, %595 : vector<16x128xf32>
    %597 = vector.broadcast %588 : vector<1x128xf32> to vector<16x128xf32>
    %598 = arith.mulf %596, %597 : vector<16x128xf32>
    %599 = vector.extract_strided_slice %1 {offsets = [6, 0], sizes = [1, 128], strides = [1, 1]} : vector<12x128xf32> to vector<1x128xf32>
    %600 = vector.broadcast %599 : vector<1x128xf32> to vector<16x128xf32>
    %601 = arith.subf %600, %0 : vector<16x128xf32>
    %602 = vector.broadcast %593 : vector<1x128xf32> to vector<16x128xf32>
    %603 = arith.mulf %601, %602 : vector<16x128xf32>
    %604 = arith.mulf %598, %399 : vector<16x128xf32>
    %605 = arith.mulf %603, %422 : vector<16x128xf32>
    %606 = arith.addf %604, %605 : vector<16x128xf32>
    %607 = vector.extract_strided_slice %1 {offsets = [6, 0], sizes = [1, 128], strides = [1, 1]} : vector<12x128xf32> to vector<1x128xf32>
    %608 = vector.extract_strided_slice %1 {offsets = [3, 0], sizes = [1, 128], strides = [1, 1]} : vector<12x128xf32> to vector<1x128xf32>
    %609 = arith.subf %607, %608 : vector<1x128xf32>
    %cst_46 = arith.constant 1.000000e+00 : f32
    %610 = vector.broadcast %cst_46 : f32 to vector<1x128xf32>
    %611 = arith.divf %610, %609 : vector<1x128xf32>
    %612 = vector.extract_strided_slice %1 {offsets = [7, 0], sizes = [1, 128], strides = [1, 1]} : vector<12x128xf32> to vector<1x128xf32>
    %613 = vector.extract_strided_slice %1 {offsets = [4, 0], sizes = [1, 128], strides = [1, 1]} : vector<12x128xf32> to vector<1x128xf32>
    %614 = arith.subf %612, %613 : vector<1x128xf32>
    %cst_47 = arith.constant 1.000000e+00 : f32
    %615 = vector.broadcast %cst_47 : f32 to vector<1x128xf32>
    %616 = arith.divf %615, %614 : vector<1x128xf32>
    %617 = vector.extract_strided_slice %1 {offsets = [3, 0], sizes = [1, 128], strides = [1, 1]} : vector<12x128xf32> to vector<1x128xf32>
    %618 = vector.broadcast %617 : vector<1x128xf32> to vector<16x128xf32>
    %619 = arith.subf %0, %618 : vector<16x128xf32>
    %620 = vector.broadcast %611 : vector<1x128xf32> to vector<16x128xf32>
    %621 = arith.mulf %619, %620 : vector<16x128xf32>
    %622 = vector.extract_strided_slice %1 {offsets = [7, 0], sizes = [1, 128], strides = [1, 1]} : vector<12x128xf32> to vector<1x128xf32>
    %623 = vector.broadcast %622 : vector<1x128xf32> to vector<16x128xf32>
    %624 = arith.subf %623, %0 : vector<16x128xf32>
    %625 = vector.broadcast %616 : vector<1x128xf32> to vector<16x128xf32>
    %626 = arith.mulf %624, %625 : vector<16x128xf32>
    %627 = arith.mulf %621, %422 : vector<16x128xf32>
    %628 = arith.mulf %626, %445 : vector<16x128xf32>
    %629 = arith.addf %627, %628 : vector<16x128xf32>
    %630 = vector.extract_strided_slice %1 {offsets = [7, 0], sizes = [1, 128], strides = [1, 1]} : vector<12x128xf32> to vector<1x128xf32>
    %631 = vector.extract_strided_slice %1 {offsets = [4, 0], sizes = [1, 128], strides = [1, 1]} : vector<12x128xf32> to vector<1x128xf32>
    %632 = arith.subf %630, %631 : vector<1x128xf32>
    %cst_48 = arith.constant 1.000000e+00 : f32
    %633 = vector.broadcast %cst_48 : f32 to vector<1x128xf32>
    %634 = arith.divf %633, %632 : vector<1x128xf32>
    %635 = vector.extract_strided_slice %1 {offsets = [8, 0], sizes = [1, 128], strides = [1, 1]} : vector<12x128xf32> to vector<1x128xf32>
    %636 = vector.extract_strided_slice %1 {offsets = [5, 0], sizes = [1, 128], strides = [1, 1]} : vector<12x128xf32> to vector<1x128xf32>
    %637 = arith.subf %635, %636 : vector<1x128xf32>
    %cst_49 = arith.constant 1.000000e+00 : f32
    %638 = vector.broadcast %cst_49 : f32 to vector<1x128xf32>
    %639 = arith.divf %638, %637 : vector<1x128xf32>
    %640 = vector.extract_strided_slice %1 {offsets = [4, 0], sizes = [1, 128], strides = [1, 1]} : vector<12x128xf32> to vector<1x128xf32>
    %641 = vector.broadcast %640 : vector<1x128xf32> to vector<16x128xf32>
    %642 = arith.subf %0, %641 : vector<16x128xf32>
    %643 = vector.broadcast %634 : vector<1x128xf32> to vector<16x128xf32>
    %644 = arith.mulf %642, %643 : vector<16x128xf32>
    %645 = vector.extract_strided_slice %1 {offsets = [8, 0], sizes = [1, 128], strides = [1, 1]} : vector<12x128xf32> to vector<1x128xf32>
    %646 = vector.broadcast %645 : vector<1x128xf32> to vector<16x128xf32>
    %647 = arith.subf %646, %0 : vector<16x128xf32>
    %648 = vector.broadcast %639 : vector<1x128xf32> to vector<16x128xf32>
    %649 = arith.mulf %647, %648 : vector<16x128xf32>
    %650 = arith.mulf %644, %445 : vector<16x128xf32>
    %651 = arith.mulf %649, %468 : vector<16x128xf32>
    %652 = arith.addf %650, %651 : vector<16x128xf32>
    %653 = vector.extract_strided_slice %1 {offsets = [8, 0], sizes = [1, 128], strides = [1, 1]} : vector<12x128xf32> to vector<1x128xf32>
    %654 = vector.extract_strided_slice %1 {offsets = [5, 0], sizes = [1, 128], strides = [1, 1]} : vector<12x128xf32> to vector<1x128xf32>
    %655 = arith.subf %653, %654 : vector<1x128xf32>
    %cst_50 = arith.constant 1.000000e+00 : f32
    %656 = vector.broadcast %cst_50 : f32 to vector<1x128xf32>
    %657 = arith.divf %656, %655 : vector<1x128xf32>
    %658 = vector.extract_strided_slice %1 {offsets = [9, 0], sizes = [1, 128], strides = [1, 1]} : vector<12x128xf32> to vector<1x128xf32>
    %659 = vector.extract_strided_slice %1 {offsets = [6, 0], sizes = [1, 128], strides = [1, 1]} : vector<12x128xf32> to vector<1x128xf32>
    %660 = arith.subf %658, %659 : vector<1x128xf32>
    %cst_51 = arith.constant 1.000000e+00 : f32
    %661 = vector.broadcast %cst_51 : f32 to vector<1x128xf32>
    %662 = arith.divf %661, %660 : vector<1x128xf32>
    %663 = vector.extract_strided_slice %1 {offsets = [5, 0], sizes = [1, 128], strides = [1, 1]} : vector<12x128xf32> to vector<1x128xf32>
    %664 = vector.broadcast %663 : vector<1x128xf32> to vector<16x128xf32>
    %665 = arith.subf %0, %664 : vector<16x128xf32>
    %666 = vector.broadcast %657 : vector<1x128xf32> to vector<16x128xf32>
    %667 = arith.mulf %665, %666 : vector<16x128xf32>
    %668 = vector.extract_strided_slice %1 {offsets = [9, 0], sizes = [1, 128], strides = [1, 1]} : vector<12x128xf32> to vector<1x128xf32>
    %669 = vector.broadcast %668 : vector<1x128xf32> to vector<16x128xf32>
    %670 = arith.subf %669, %0 : vector<16x128xf32>
    %671 = vector.broadcast %662 : vector<1x128xf32> to vector<16x128xf32>
    %672 = arith.mulf %670, %671 : vector<16x128xf32>
    %673 = arith.mulf %667, %468 : vector<16x128xf32>
    %674 = arith.mulf %672, %491 : vector<16x128xf32>
    %675 = arith.addf %673, %674 : vector<16x128xf32>
    %676 = vector.extract_strided_slice %1 {offsets = [9, 0], sizes = [1, 128], strides = [1, 1]} : vector<12x128xf32> to vector<1x128xf32>
    %677 = vector.extract_strided_slice %1 {offsets = [6, 0], sizes = [1, 128], strides = [1, 1]} : vector<12x128xf32> to vector<1x128xf32>
    %678 = arith.subf %676, %677 : vector<1x128xf32>
    %cst_52 = arith.constant 1.000000e+00 : f32
    %679 = vector.broadcast %cst_52 : f32 to vector<1x128xf32>
    %680 = arith.divf %679, %678 : vector<1x128xf32>
    %681 = vector.extract_strided_slice %1 {offsets = [10, 0], sizes = [1, 128], strides = [1, 1]} : vector<12x128xf32> to vector<1x128xf32>
    %682 = vector.extract_strided_slice %1 {offsets = [7, 0], sizes = [1, 128], strides = [1, 1]} : vector<12x128xf32> to vector<1x128xf32>
    %683 = arith.subf %681, %682 : vector<1x128xf32>
    %cst_53 = arith.constant 1.000000e+00 : f32
    %684 = vector.broadcast %cst_53 : f32 to vector<1x128xf32>
    %685 = arith.divf %684, %683 : vector<1x128xf32>
    %686 = vector.extract_strided_slice %1 {offsets = [6, 0], sizes = [1, 128], strides = [1, 1]} : vector<12x128xf32> to vector<1x128xf32>
    %687 = vector.broadcast %686 : vector<1x128xf32> to vector<16x128xf32>
    %688 = arith.subf %0, %687 : vector<16x128xf32>
    %689 = vector.broadcast %680 : vector<1x128xf32> to vector<16x128xf32>
    %690 = arith.mulf %688, %689 : vector<16x128xf32>
    %691 = vector.extract_strided_slice %1 {offsets = [10, 0], sizes = [1, 128], strides = [1, 1]} : vector<12x128xf32> to vector<1x128xf32>
    %692 = vector.broadcast %691 : vector<1x128xf32> to vector<16x128xf32>
    %693 = arith.subf %692, %0 : vector<16x128xf32>
    %694 = vector.broadcast %685 : vector<1x128xf32> to vector<16x128xf32>
    %695 = arith.mulf %693, %694 : vector<16x128xf32>
    %696 = arith.mulf %690, %491 : vector<16x128xf32>
    %697 = arith.mulf %695, %514 : vector<16x128xf32>
    %698 = arith.addf %696, %697 : vector<16x128xf32>
    %699 = vector.extract_strided_slice %1 {offsets = [10, 0], sizes = [1, 128], strides = [1, 1]} : vector<12x128xf32> to vector<1x128xf32>
    %700 = vector.extract_strided_slice %1 {offsets = [7, 0], sizes = [1, 128], strides = [1, 1]} : vector<12x128xf32> to vector<1x128xf32>
    %701 = arith.subf %699, %700 : vector<1x128xf32>
    %cst_54 = arith.constant 1.000000e+00 : f32
    %702 = vector.broadcast %cst_54 : f32 to vector<1x128xf32>
    %703 = arith.divf %702, %701 : vector<1x128xf32>
    %704 = vector.extract_strided_slice %1 {offsets = [11, 0], sizes = [1, 128], strides = [1, 1]} : vector<12x128xf32> to vector<1x128xf32>
    %705 = vector.extract_strided_slice %1 {offsets = [8, 0], sizes = [1, 128], strides = [1, 1]} : vector<12x128xf32> to vector<1x128xf32>
    %706 = arith.subf %704, %705 : vector<1x128xf32>
    %cst_55 = arith.constant 1.000000e+00 : f32
    %707 = vector.broadcast %cst_55 : f32 to vector<1x128xf32>
    %708 = arith.divf %707, %706 : vector<1x128xf32>
    %709 = vector.extract_strided_slice %1 {offsets = [7, 0], sizes = [1, 128], strides = [1, 1]} : vector<12x128xf32> to vector<1x128xf32>
    %710 = vector.broadcast %709 : vector<1x128xf32> to vector<16x128xf32>
    %711 = arith.subf %0, %710 : vector<16x128xf32>
    %712 = vector.broadcast %703 : vector<1x128xf32> to vector<16x128xf32>
    %713 = arith.mulf %711, %712 : vector<16x128xf32>
    %714 = vector.extract_strided_slice %1 {offsets = [11, 0], sizes = [1, 128], strides = [1, 1]} : vector<12x128xf32> to vector<1x128xf32>
    %715 = vector.broadcast %714 : vector<1x128xf32> to vector<16x128xf32>
    %716 = arith.subf %715, %0 : vector<16x128xf32>
    %717 = vector.broadcast %708 : vector<1x128xf32> to vector<16x128xf32>
    %718 = arith.mulf %716, %717 : vector<16x128xf32>
    %719 = arith.mulf %713, %514 : vector<16x128xf32>
    %720 = arith.mulf %718, %537 : vector<16x128xf32>
    %721 = arith.addf %719, %720 : vector<16x128xf32>
    %cst_56 = arith.constant 0.000000e+00 : f32
    %722 = vector.broadcast %cst_56 : f32 to vector<16x128xf32>
    %723 = arith.subf %722, %0 : vector<16x128xf32>
    %724 = math.exp %723 : vector<16x128xf32>
    %cst_57 = arith.constant 1.000000e+00 : f32
    %725 = vector.broadcast %cst_57 : f32 to vector<16x128xf32>
    %726 = arith.addf %725, %724 : vector<16x128xf32>
    %cst_58 = arith.constant 1.000000e+00 : f32
    %727 = vector.broadcast %cst_58 : f32 to vector<16x128xf32>
    %728 = arith.divf %727, %726 : vector<16x128xf32>
    %729 = arith.mulf %0, %728 : vector<16x128xf32>
    %730 = arith.truncf %729 : vector<16x128xf32> to vector<16x128xbf16>
    %c0_59 = arith.constant 0 : index
    %c0_60 = arith.constant 0 : index
    %731 = vector.load %arg4[%c0_59, %c0_60] : memref<128x128xbf16, #tpu.memory_space<vmem>>, vector<128x128xbf16>
    %cst_61 = arith.constant dense<0.000000e+00> : vector<16x128xf32>
    %732 = tpu.matmul %730, %731, %cst_61 {dimension_numbers = #tpu.dot_dimension_numbers<[1], [0], [0], [1], [0, 0, 1, 1], [], []>} : vector<16x128xbf16>, vector<128x128xbf16>, vector<16x128xf32> -> vector<16x128xf32>
    %733 = arith.truncf %560 : vector<16x128xf32> to vector<16x128xbf16>
    %c0_62 = arith.constant 0 : index
    %c0_63 = arith.constant 0 : index
    %c0_64 = arith.constant 0 : index
    %734 = vector.load %arg5[%c0_62, %c0_63, %c0_64] : memref<8x128x128xbf16, #tpu.memory_space<vmem>>, vector<1x128x128xbf16>
    %735 = vector.shape_cast %734 : vector<1x128x128xbf16> to vector<128x128xbf16>
    %cst_65 = arith.constant dense<0.000000e+00> : vector<16x128xf32>
    %736 = tpu.matmul %733, %735, %cst_65 {dimension_numbers = #tpu.dot_dimension_numbers<[1], [0], [0], [1], [0, 0, 1, 1], [], []>} : vector<16x128xbf16>, vector<128x128xbf16>, vector<16x128xf32> -> vector<16x128xf32>
    %737 = arith.addf %732, %736 : vector<16x128xf32>
    %738 = arith.truncf %583 : vector<16x128xf32> to vector<16x128xbf16>
    %c1 = arith.constant 1 : index
    %c0_66 = arith.constant 0 : index
    %c0_67 = arith.constant 0 : index
    %739 = vector.load %arg5[%c1, %c0_66, %c0_67] : memref<8x128x128xbf16, #tpu.memory_space<vmem>>, vector<1x128x128xbf16>
    %740 = vector.shape_cast %739 : vector<1x128x128xbf16> to vector<128x128xbf16>
    %cst_68 = arith.constant dense<0.000000e+00> : vector<16x128xf32>
    %741 = tpu.matmul %738, %740, %cst_68 {dimension_numbers = #tpu.dot_dimension_numbers<[1], [0], [0], [1], [0, 0, 1, 1], [], []>} : vector<16x128xbf16>, vector<128x128xbf16>, vector<16x128xf32> -> vector<16x128xf32>
    %742 = arith.addf %737, %741 : vector<16x128xf32>
    %743 = arith.truncf %606 : vector<16x128xf32> to vector<16x128xbf16>
    %c2 = arith.constant 2 : index
    %c0_69 = arith.constant 0 : index
    %c0_70 = arith.constant 0 : index
    %744 = vector.load %arg5[%c2, %c0_69, %c0_70] : memref<8x128x128xbf16, #tpu.memory_space<vmem>>, vector<1x128x128xbf16>
    %745 = vector.shape_cast %744 : vector<1x128x128xbf16> to vector<128x128xbf16>
    %cst_71 = arith.constant dense<0.000000e+00> : vector<16x128xf32>
    %746 = tpu.matmul %743, %745, %cst_71 {dimension_numbers = #tpu.dot_dimension_numbers<[1], [0], [0], [1], [0, 0, 1, 1], [], []>} : vector<16x128xbf16>, vector<128x128xbf16>, vector<16x128xf32> -> vector<16x128xf32>
    %747 = arith.addf %742, %746 : vector<16x128xf32>
    %748 = arith.truncf %629 : vector<16x128xf32> to vector<16x128xbf16>
    %c3 = arith.constant 3 : index
    %c0_72 = arith.constant 0 : index
    %c0_73 = arith.constant 0 : index
    %749 = vector.load %arg5[%c3, %c0_72, %c0_73] : memref<8x128x128xbf16, #tpu.memory_space<vmem>>, vector<1x128x128xbf16>
    %750 = vector.shape_cast %749 : vector<1x128x128xbf16> to vector<128x128xbf16>
    %cst_74 = arith.constant dense<0.000000e+00> : vector<16x128xf32>
    %751 = tpu.matmul %748, %750, %cst_74 {dimension_numbers = #tpu.dot_dimension_numbers<[1], [0], [0], [1], [0, 0, 1, 1], [], []>} : vector<16x128xbf16>, vector<128x128xbf16>, vector<16x128xf32> -> vector<16x128xf32>
    %752 = arith.addf %747, %751 : vector<16x128xf32>
    %753 = arith.truncf %652 : vector<16x128xf32> to vector<16x128xbf16>
    %c4 = arith.constant 4 : index
    %c0_75 = arith.constant 0 : index
    %c0_76 = arith.constant 0 : index
    %754 = vector.load %arg5[%c4, %c0_75, %c0_76] : memref<8x128x128xbf16, #tpu.memory_space<vmem>>, vector<1x128x128xbf16>
    %755 = vector.shape_cast %754 : vector<1x128x128xbf16> to vector<128x128xbf16>
    %cst_77 = arith.constant dense<0.000000e+00> : vector<16x128xf32>
    %756 = tpu.matmul %753, %755, %cst_77 {dimension_numbers = #tpu.dot_dimension_numbers<[1], [0], [0], [1], [0, 0, 1, 1], [], []>} : vector<16x128xbf16>, vector<128x128xbf16>, vector<16x128xf32> -> vector<16x128xf32>
    %757 = arith.addf %752, %756 : vector<16x128xf32>
    %758 = arith.truncf %675 : vector<16x128xf32> to vector<16x128xbf16>
    %c5 = arith.constant 5 : index
    %c0_78 = arith.constant 0 : index
    %c0_79 = arith.constant 0 : index
    %759 = vector.load %arg5[%c5, %c0_78, %c0_79] : memref<8x128x128xbf16, #tpu.memory_space<vmem>>, vector<1x128x128xbf16>
    %760 = vector.shape_cast %759 : vector<1x128x128xbf16> to vector<128x128xbf16>
    %cst_80 = arith.constant dense<0.000000e+00> : vector<16x128xf32>
    %761 = tpu.matmul %758, %760, %cst_80 {dimension_numbers = #tpu.dot_dimension_numbers<[1], [0], [0], [1], [0, 0, 1, 1], [], []>} : vector<16x128xbf16>, vector<128x128xbf16>, vector<16x128xf32> -> vector<16x128xf32>
    %762 = arith.addf %757, %761 : vector<16x128xf32>
    %763 = arith.truncf %698 : vector<16x128xf32> to vector<16x128xbf16>
    %c6 = arith.constant 6 : index
    %c0_81 = arith.constant 0 : index
    %c0_82 = arith.constant 0 : index
    %764 = vector.load %arg5[%c6, %c0_81, %c0_82] : memref<8x128x128xbf16, #tpu.memory_space<vmem>>, vector<1x128x128xbf16>
    %765 = vector.shape_cast %764 : vector<1x128x128xbf16> to vector<128x128xbf16>
    %cst_83 = arith.constant dense<0.000000e+00> : vector<16x128xf32>
    %766 = tpu.matmul %763, %765, %cst_83 {dimension_numbers = #tpu.dot_dimension_numbers<[1], [0], [0], [1], [0, 0, 1, 1], [], []>} : vector<16x128xbf16>, vector<128x128xbf16>, vector<16x128xf32> -> vector<16x128xf32>
    %767 = arith.addf %762, %766 : vector<16x128xf32>
    %768 = arith.truncf %721 : vector<16x128xf32> to vector<16x128xbf16>
    %c7 = arith.constant 7 : index
    %c0_84 = arith.constant 0 : index
    %c0_85 = arith.constant 0 : index
    %769 = vector.load %arg5[%c7, %c0_84, %c0_85] : memref<8x128x128xbf16, #tpu.memory_space<vmem>>, vector<1x128x128xbf16>
    %770 = vector.shape_cast %769 : vector<1x128x128xbf16> to vector<128x128xbf16>
    %cst_86 = arith.constant dense<0.000000e+00> : vector<16x128xf32>
    %771 = tpu.matmul %768, %770, %cst_86 {dimension_numbers = #tpu.dot_dimension_numbers<[1], [0], [0], [1], [0, 0, 1, 1], [], []>} : vector<16x128xbf16>, vector<128x128xbf16>, vector<16x128xf32> -> vector<16x128xf32>
    %772 = arith.addf %767, %771 : vector<16x128xf32>
    %c0_87 = arith.constant 0 : index
    %c0_88 = arith.constant 0 : index
    %773 = vector.load %arg6[%c0_87, %c0_88] : memref<16x128xf32, #tpu.memory_space<vmem>>, vector<16x128xf32>
    tpu.vector_store %arg6[%c0_87, %c0_88], %772 {strides = array<i32>} : memref<16x128xf32, #tpu.memory_space<vmem>>, vector<16x128xf32>,
    return
  }
  func.func @transform_0(%arg0: i32, %arg1: i32) -> (i32, i32) {
    %c0_i32 = arith.constant 0 : i32
    %c0_i32_0 = arith.constant 0 : i32
    return %arg0, %c0_i32 : i32, i32
  }
  func.func @transform_1(%arg0: i32, %arg1: i32) -> (i32, i32) {
    %c0_i32 = arith.constant 0 : i32
    %c0_i32_0 = arith.constant 0 : i32
    %c0_i32_1 = arith.constant 0 : i32
    return %c0_i32, %c0_i32_0 : i32, i32
  }
  func.func @transform_2(%arg0: i32, %arg1: i32) -> (i32, i32) {
    %c0_i32 = arith.constant 0 : i32
    %c0_i32_0 = arith.constant 0 : i32
    return %c0_i32, %arg1 : i32, i32
  }
  func.func @transform_3(%arg0: i32, %arg1: i32) -> (i32, i32, i32) {
    %c0_i32 = arith.constant 0 : i32
    %c0_i32_0 = arith.constant 0 : i32
    %c0_i32_1 = arith.constant 0 : i32
    return %c0_i32, %c0_i32_0, %arg1 : i32, i32, i32
  }
  func.func @transform_4(%arg0: i32, %arg1: i32) -> (i32, i32) {
    %c0_i32 = arith.constant 0 : i32
    return %arg0, %arg1 : i32, i32
  }
}

</mosaic_0001>

<llo_original>
// kernel: tpu_custom_call.1
$region0: #{tpu_custom_call.1}
  #allocation0 [shape = 'u32[]', space=smem, size = 0x4, offset = 0x4, fixed_abs, tag = 'smem constant byte address 0x4 - core index']
  #allocation1 [shape = 'u32[144,128]{1,0:T(1,128)}', space=vmem, size = 0x12000, scoped, tag = 'internal scratch']
  %s0 = inlined_call_operand.hbm [shape: f32[16,128], index: 0, kind: input, shape index: {}]
  %s1 = inlined_call_operand.hbm [shape: f32[12,128], index: 1, kind: input, shape index: {}]
  %s2 = inlined_call_operand.hbm [shape: bf16[128,128], index: 2, kind: input, shape index: {}]
  %s3 = inlined_call_operand.hbm [shape: bf16[8,128,128], index: 3, kind: input, shape index: {}]
  %s4 = inlined_call_operand.hbm [shape: f32[16,128], index: 4, kind: output, shape index: {}]
  %s5 = sld [smem:[#allocation0]]
  $region42: #{tpu_custom_call.1} parent=0
    _
  %s7 = ssub.s32 1, %s5
  %s8 = scalar_select 0, %s7, %s5
  $region1: #{tpu_custom_call.1} parent=0
    #allocation2 [shape = 'u8[8192]{0}', space=vmem, size = 0x2000, scoped, tag = 'input window, operand 0, single buffered']
    #allocation3 [shape = 's32[1]{0}', space=sflag, size = 0x4, scoped, tag = 'scoped memory for tpu_custom_call.1']
    #allocation4 [shape = 's32[1]{0}', space=sflag, size = 0x4, scoped, tag = 'scoped memory for tpu_custom_call.1']
    #allocation5 [shape = 'u8[8192]{0}', space=vmem, size = 0x2000, scoped, tag = 'input window, operand 1, single buffered']
    #allocation6 [shape = 's32[1]{0}', space=sflag, size = 0x4, scoped, tag = 'scoped memory for tpu_custom_call.1']
    #allocation7 [shape = 'u8[32768]{0}', space=vmem, size = 0x8000, scoped, tag = 'input window, operand 2, single buffered']
    #allocation8 [shape = 'u8[262144]{0}', space=vmem, size = 0x40000, scoped, tag = 'input window, operand 3, single buffered']
    #allocation9 [shape = 's32[1]{0}', space=sflag, size = 0x4, scoped, tag = 'scoped memory for tpu_custom_call.1']
    #allocation10 [shape = 'u8[8192]{0}', space=vmem, size = 0x2000, scoped, tag = 'output window, operand 0, single buffered']
    %9 = vsyncpa [#allocation3], 0
    %10 = vsyncpa [#allocation6], 0
    %11 = vsyncpa [#allocation9], 0
    %12 = vsyncpa [#allocation4], 0
    // Predicated region
    $region2: #{tpu_custom_call.1} parent=1 // pred_check
      _
    $region3: #{tpu_custom_call.1} parent=1 // pred_check_branch
      %14 = sbr.rel (0) target = $region5
    $region4: #{tpu_custom_call.1} parent=1 // pred_region
      %s16 = ssub.s32 256, 256
      %17 = vsyncadd [#allocation3], %s16
      %s18 = sshll.u32 [#allocation2], 4
      %s19 = int_to_ptr.vmem [resolvable:$true] %s18
      %24 = dma.hbm_to_vmem [thread:$0]  %s0, 256, %s19, [#allocation3], 128, 128, 8
    $region5: #{tpu_custom_call.1} parent=1 // pred_fallthru
      _
    // Predicated region
    $region6: #{tpu_custom_call.1} parent=1 // pred_check
      _
    $region7: #{tpu_custom_call.1} parent=1 // pred_check_branch
      %26 = sbr.rel (0) target = $region9
    $region8: #{tpu_custom_call.1} parent=1 // pred_region
      %s28 = ssub.s32 256, 256
      %29 = vsyncadd [#allocation6], %s28
      %s30 = sshll.u32 [#allocation5], 4
      %s31 = int_to_ptr.vmem [resolvable:$true] %s30
      %36 = dma.hbm_to_vmem [thread:$0]  %s1, 256, %s31, [#allocation6], 128, 128, 8
    $region9: #{tpu_custom_call.1} parent=1 // pred_fallthru
      _
    // Predicated region
    $region10: #{tpu_custom_call.1} parent=1 // pred_check
      _
    $region11: #{tpu_custom_call.1} parent=1 // pred_check_branch
      %38 = sbr.rel (0) target = $region13
    $region12: #{tpu_custom_call.1} parent=1 // pred_region
      %s40 = ssub.s32 1024, 1024
      %41 = vsyncadd [#allocation6], %s40
      %s42 = sshll.u32 [#allocation7], 4
      %s43 = int_to_ptr.vmem [resolvable:$true] %s42
      %48 = dma.hbm_to_vmem [thread:$0]  %s2, 1024, %s43, [#allocation6], 64, 64, 4
    $region13: #{tpu_custom_call.1} parent=1 // pred_fallthru
      _
    // Predicated region
    $region14: #{tpu_custom_call.1} parent=1 // pred_check
      _
    $region15: #{tpu_custom_call.1} parent=1 // pred_check_branch
      %50 = sbr.rel (0) target = $region17
    $region16: #{tpu_custom_call.1} parent=1 // pred_region
      %s52 = ssub.s32 8192, 8192
      %53 = vsyncadd [#allocation9], %s52
      %s54 = sshll.u32 [#allocation8], 4
      %s55 = int_to_ptr.vmem [resolvable:$true] %s54
      %60 = dma.hbm_to_vmem [thread:$0]  %s3, 8192, %s55, [#allocation9], 64, 64, 4
    $region17: #{tpu_custom_call.1} parent=1 // pred_fallthru
      _
    // Predicated region
    $region18: #{tpu_custom_call.1} parent=1 // pred_check
      _
    $region19: #{tpu_custom_call.1} parent=1 // pred_check_branch
      %62 = sbr.rel (0) target = $region21
    $region20: #{tpu_custom_call.1} parent=1 // pred_region
      %63 = dma.done [#allocation3], 256
    $region21: #{tpu_custom_call.1} parent=1 // pred_fallthru
      _
    // Predicated region
    $region22: #{tpu_custom_call.1} parent=1 // pred_check
      _
    $region23: #{tpu_custom_call.1} parent=1 // pred_check_branch
      %65 = sbr.rel (0) target = $region25
    $region24: #{tpu_custom_call.1} parent=1 // pred_region
      %66 = dma.done [#allocation6], 256
    $region25: #{tpu_custom_call.1} parent=1 // pred_fallthru
      _
    // Predicated region
    $region26: #{tpu_custom_call.1} parent=1 // pred_check
      _
    $region27: #{tpu_custom_call.1} parent=1 // pred_check_branch
      %68 = sbr.rel (0) target = $region29
    $region28: #{tpu_custom_call.1} parent=1 // pred_region
      %69 = dma.done [#allocation6], 1024
    $region29: #{tpu_custom_call.1} parent=1 // pred_fallthru
      _
    // Predicated region
    $region30: #{tpu_custom_call.1} parent=1 // pred_check
      _
    $region31: #{tpu_custom_call.1} parent=1 // pred_check_branch
      %71 = sbr.rel (0) target = $region33
    $region32: #{tpu_custom_call.1} parent=1 // pred_region
      %72 = dma.done [#allocation9], 8192
    $region33: #{tpu_custom_call.1} parent=1 // pred_fallthru
      _
    %v74 = vld [vmem:[#allocation2] sm:$0xff]
    %v75 = vld [vmem:[#allocation2 + $0x8] sm:$0xff]
    %v76 = vld [vmem:[#allocation5] sm:$0xff]
    %v77 = vld [vmem:[#allocation5 + $0x8] sm:$0xf]
    %v78 = vlaneseq
    %v79 = vshrl.u32 %v78, 7
    %v80 = vsub.s32 0, %v79
    %v81 = vrot.slane %v76, %v80
    %vm82 = vcmp.ge.f32.partialorder %v74, %v81
    %vm83 = vcmp.ge.f32.partialorder %v75, %v81
    %v84 = vlaneseq
    %v85 = vshrl.u32 %v84, 7
    %v86 = vsub.s32 1, %v85
    %v87 = vrot.slane %v76, %v86
    %vm88 = vcmp.lt.f32.partialorder %v74, %v87
    %vm89 = vcmp.lt.f32.partialorder %v75, %v87
    %vm90 = vmand %vm82, %vm88
    %vm91 = vmand %vm83, %vm89
    %v92 = vsel %vm90, 1, 0
    %v93 = vsel %vm91, 1, 0
    %v94 = vcvt.s32.f32 %v92
    %v95 = vcvt.s32.f32 %v93
    %vm96 = vcmp.ge.f32.partialorder %v74, %v87
    %vm97 = vcmp.ge.f32.partialorder %v75, %v87
    %v98 = vlaneseq
    %v99 = vshrl.u32 %v98, 7
    %v100 = vsub.s32 2, %v99
    %v101 = vrot.slane %v76, %v100
    %vm102 = vcmp.lt.f32.partialorder %v74, %v101
    %vm103 = vcmp.lt.f32.partialorder %v75, %v101
    %vm104 = vmand %vm96, %vm102
    %vm105 = vmand %vm97, %vm103
    %v106 = vsel %vm104, 1, 0
    %v107 = vsel %vm105, 1, 0
    %v108 = vcvt.s32.f32 %v106
    %v109 = vcvt.s32.f32 %v107
    %vm110 = vcmp.ge.f32.partialorder %v74, %v101
    %vm111 = vcmp.ge.f32.partialorder %v75, %v101
    %v112 = vlaneseq
    %v113 = vshrl.u32 %v112, 7
    %v114 = vsub.s32 3, %v113
    %v115 = vrot.slane %v76, %v114
    %vm116 = vcmp.lt.f32.partialorder %v74, %v115
    %vm117 = vcmp.lt.f32.partialorder %v75, %v115
    %vm118 = vmand %vm110, %vm116
    %vm119 = vmand %vm111, %vm117
    %v120 = vsel %vm118, 1, 0
    %v121 = vsel %vm119, 1, 0
    %v122 = vcvt.s32.f32 %v120
    %v123 = vcvt.s32.f32 %v121
    %vm124 = vcmp.ge.f32.partialorder %v74, %v115
    %vm125 = vcmp.ge.f32.partialorder %v75, %v115
    %v126 = vlaneseq
    %v127 = vshrl.u32 %v126, 7
    %v128 = vsub.s32 4, %v127
    %v129 = vrot.slane %v76, %v128
    %vm130 = vcmp.lt.f32.partialorder %v74, %v129
    %vm131 = vcmp.lt.f32.partialorder %v75, %v129
    %vm132 = vmand %vm124, %vm130
    %vm133 = vmand %vm125, %vm131
    %v134 = vsel %vm132, 1, 0
    %v135 = vsel %vm133, 1, 0
    %v136 = vcvt.s32.f32 %v134
    %v137 = vcvt.s32.f32 %v135
    %vm138 = vcmp.ge.f32.partialorder %v74, %v129
    %vm139 = vcmp.ge.f32.partialorder %v75, %v129
    %v140 = vlaneseq
    %v141 = vshrl.u32 %v140, 7
    %v142 = vsub.s32 5, %v141
    %v143 = vrot.slane %v76, %v142
    %vm144 = vcmp.lt.f32.partialorder %v74, %v143
    %vm145 = vcmp.lt.f32.partialorder %v75, %v143
    %vm146 = vmand %vm138, %vm144
    %vm147 = vmand %vm139, %vm145
    %v148 = vsel %vm146, 1, 0
    %v149 = vsel %vm147, 1, 0
    %v150 = vcvt.s32.f32 %v148
    %v151 = vcvt.s32.f32 %v149
    %vm152 = vcmp.ge.f32.partialorder %v74, %v143
    %vm153 = vcmp.ge.f32.partialorder %v75, %v143
    %v154 = vlaneseq
    %v155 = vshrl.u32 %v154, 7
    %v156 = vsub.s32 6, %v155
    %v157 = vrot.slane %v76, %v156
    %vm158 = vcmp.lt.f32.partialorder %v74, %v157
    %vm159 = vcmp.lt.f32.partialorder %v75, %v157
    %vm160 = vmand %vm152, %vm158
    %vm161 = vmand %vm153, %vm159
    %v162 = vsel %vm160, 1, 0
    %v163 = vsel %vm161, 1, 0
    %v164 = vcvt.s32.f32 %v162
    %v165 = vcvt.s32.f32 %v163
    %vm166 = vcmp.ge.f32.partialorder %v74, %v157
    %vm167 = vcmp.ge.f32.partialorder %v75, %v157
    %v168 = vlaneseq
    %v169 = vshrl.u32 %v168, 7
    %v170 = vsub.s32 7, %v169
    %v171 = vrot.slane %v76, %v170
    %vm172 = vcmp.lt.f32.partialorder %v74, %v171
    %vm173 = vcmp.lt.f32.partialorder %v75, %v171
    %vm174 = vmand %vm166, %vm172
    %vm175 = vmand %vm167, %vm173
    %v176 = vsel %vm174, 1, 0
    %v177 = vsel %vm175, 1, 0
    %v178 = vcvt.s32.f32 %v176
    %v179 = vcvt.s32.f32 %v177
    %vm180 = vcmp.ge.f32.partialorder %v74, %v171
    %vm181 = vcmp.ge.f32.partialorder %v75, %v171
    %v182 = vlaneseq
    %v183 = vshrl.u32 %v182, 7
    %v184 = vsub.s32 0, %v183
    %v185 = vrot.slane %v77, %v184
    %vm186 = vcmp.lt.f32.partialorder %v74, %v185
    %vm187 = vcmp.lt.f32.partialorder %v75, %v185
    %vm188 = vmand %vm180, %vm186
    %vm189 = vmand %vm181, %vm187
    %v190 = vsel %vm188, 1, 0
    %v191 = vsel %vm189, 1, 0
    %v192 = vcvt.s32.f32 %v190
    %v193 = vcvt.s32.f32 %v191
    %vm194 = vcmp.ge.f32.partialorder %v74, %v185
    %vm195 = vcmp.ge.f32.partialorder %v75, %v185
    %v196 = vlaneseq
    %v197 = vshrl.u32 %v196, 7
    %v198 = vsub.s32 1, %v197
    %v199 = vrot.slane %v77, %v198
    %vm200 = vcmp.lt.f32.partialorder %v74, %v199
    %vm201 = vcmp.lt.f32.partialorder %v75, %v199
    %vm202 = vmand %vm194, %vm200
    %vm203 = vmand %vm195, %vm201
    %v204 = vsel %vm202, 1, 0
    %v205 = vsel %vm203, 1, 0
    %v206 = vcvt.s32.f32 %v204
    %v207 = vcvt.s32.f32 %v205
    %vm208 = vcmp.ge.f32.partialorder %v74, %v199
    %vm209 = vcmp.ge.f32.partialorder %v75, %v199
    %v210 = vlaneseq
    %v211 = vshrl.u32 %v210, 7
    %v212 = vsub.s32 2, %v211
    %v213 = vrot.slane %v77, %v212
    %vm214 = vcmp.lt.f32.partialorder %v74, %v213
    %vm215 = vcmp.lt.f32.partialorder %v75, %v213
    %vm216 = vmand %vm208, %vm214
    %vm217 = vmand %vm209, %vm215
    %v218 = vsel %vm216, 1, 0
    %v219 = vsel %vm217, 1, 0
    %v220 = vcvt.s32.f32 %v218
    %v221 = vcvt.s32.f32 %v219
    %vm222 = vcmp.ge.f32.partialorder %v74, %v213
    %vm223 = vcmp.ge.f32.partialorder %v75, %v213
    %v224 = vlaneseq
    %v225 = vshrl.u32 %v224, 7
    %v226 = vsub.s32 3, %v225
    %v227 = vrot.slane %v77, %v226
    %vm228 = vcmp.lt.f32.partialorder %v74, %v227
    %vm229 = vcmp.lt.f32.partialorder %v75, %v227
    %vm230 = vmand %vm222, %vm228
    %vm231 = vmand %vm223, %vm229
    %v232 = vsel %vm230, 1, 0
    %v233 = vsel %vm231, 1, 0
    %v234 = vcvt.s32.f32 %v232
    %v235 = vcvt.s32.f32 %v233
    %v237 = vrot.slane %v76, 7
    %v239 = vsub.f32 %v76, %v237
    %v240 = vrcp.pop %v239
    %v241 = vmul.f32 1.0, %v240
    %v242 = vsub.f32 %v74, %v81
    %v243 = vsub.f32 %v75, %v81
    %v244 = vlaneseq
    %v245 = vshrl.u32 %v244, 7
    %v246 = vsub.s32 1, %v245
    %v247 = vrot.slane %v241, %v246
    %v248 = vmul.f32 %v242, %v247
    %v249 = vmul.f32 %v243, %v247
    %v250 = vsub.f32 %v101, %v74
    %v251 = vsub.f32 %v101, %v75
    %v252 = vlaneseq
    %v253 = vshrl.u32 %v252, 7
    %v254 = vsub.s32 2, %v253
    %v255 = vrot.slane %v241, %v254
    %v256 = vmul.f32 %v250, %v255
    %v257 = vmul.f32 %v251, %v255
    %v258 = vmul.f32 %v248, %v94
    %v259 = vmul.f32 %v249, %v95
    %v260 = vmul.f32 %v256, %v108
    %v261 = vmul.f32 %v257, %v109
    %v262 = vadd.f32 %v258, %v260
    %v263 = vadd.f32 %v259, %v261
    %v264 = vsub.f32 %v74, %v87
    %v265 = vsub.f32 %v75, %v87
    %v266 = vmul.f32 %v264, %v255
    %v267 = vmul.f32 %v265, %v255
    %v268 = vsub.f32 %v115, %v74
    %v269 = vsub.f32 %v115, %v75
    %v270 = vlaneseq
    %v271 = vshrl.u32 %v270, 7
    %v272 = vsub.s32 3, %v271
    %v273 = vrot.slane %v241, %v272
    %v274 = vmul.f32 %v268, %v273
    %v275 = vmul.f32 %v269, %v273
    %v276 = vmul.f32 %v266, %v108
    %v277 = vmul.f32 %v267, %v109
    %v278 = vmul.f32 %v274, %v122
    %v279 = vmul.f32 %v275, %v123
    %v280 = vadd.f32 %v276, %v278
    %v281 = vadd.f32 %v277, %v279
    %v282 = vsub.f32 %v74, %v101
    %v283 = vsub.f32 %v75, %v101
    %v284 = vmul.f32 %v282, %v273
    %v285 = vmul.f32 %v283, %v273
    %v286 = vsub.f32 %v129, %v74
    %v287 = vsub.f32 %v129, %v75
    %v288 = vlaneseq
    %v289 = vshrl.u32 %v288, 7
    %v290 = vsub.s32 4, %v289
    %v291 = vrot.slane %v241, %v290
    %v292 = vmul.f32 %v286, %v291
    %v293 = vmul.f32 %v287, %v291
    %v294 = vmul.f32 %v284, %v122
    %v295 = vmul.f32 %v285, %v123
    %v296 = vmul.f32 %v292, %v136
    %v297 = vmul.f32 %v293, %v137
    %v298 = vadd.f32 %v294, %v296
    %v299 = vadd.f32 %v295, %v297
    %v300 = vsub.f32 %v74, %v115
    %v301 = vsub.f32 %v75, %v115
    %v302 = vmul.f32 %v300, %v291
    %v303 = vmul.f32 %v301, %v291
    %v304 = vsub.f32 %v143, %v74
    %v305 = vsub.f32 %v143, %v75
    %v306 = vlaneseq
    %v307 = vshrl.u32 %v306, 7
    %v308 = vsub.s32 5, %v307
    %v309 = vrot.slane %v241, %v308
    %v310 = vmul.f32 %v304, %v309
    %v311 = vmul.f32 %v305, %v309
    %v312 = vmul.f32 %v302, %v136
    %v313 = vmul.f32 %v303, %v137
    %v314 = vmul.f32 %v310, %v150
    %v315 = vmul.f32 %v311, %v151
    %v316 = vadd.f32 %v312, %v314
    %v317 = vadd.f32 %v313, %v315
    %v318 = vsub.f32 %v74, %v129
    %v319 = vsub.f32 %v75, %v129
    %v320 = vmul.f32 %v318, %v309
    %v321 = vmul.f32 %v319, %v309
    %v322 = vsub.f32 %v157, %v74
    %v323 = vsub.f32 %v157, %v75
    %v324 = vlaneseq
    %v325 = vshrl.u32 %v324, 7
    %v326 = vsub.s32 6, %v325
    %v327 = vrot.slane %v241, %v326
    %v328 = vmul.f32 %v322, %v327
    %v329 = vmul.f32 %v323, %v327
    %v330 = vmul.f32 %v320, %v150
    %v331 = vmul.f32 %v321, %v151
    %v332 = vmul.f32 %v328, %v164
    %v333 = vmul.f32 %v329, %v165
    %v334 = vadd.f32 %v330, %v332
    %v335 = vadd.f32 %v331, %v333
    %v336 = vsub.f32 %v74, %v143
    %v337 = vsub.f32 %v75, %v143
    %v338 = vmul.f32 %v336, %v327
    %v339 = vmul.f32 %v337, %v327
    %v340 = vsub.f32 %v171, %v74
    %v341 = vsub.f32 %v171, %v75
    %v342 = vlaneseq
    %v343 = vshrl.u32 %v342, 7
    %v344 = vsub.s32 7, %v343
    %v345 = vrot.slane %v241, %v344
    %v346 = vmul.f32 %v340, %v345
    %v347 = vmul.f32 %v341, %v345
    %v348 = vmul.f32 %v338, %v164
    %v349 = vmul.f32 %v339, %v165
    %v350 = vmul.f32 %v346, %v178
    %v351 = vmul.f32 %v347, %v179
    %v352 = vadd.f32 %v348, %v350
    %v353 = vadd.f32 %v349, %v351
    %v354 = vsub.f32 %v77, %v237
    %v355 = vrcp.pop %v354
    %v356 = vmul.f32 1.0, %v355
    %v357 = vsub.f32 %v74, %v157
    %v358 = vsub.f32 %v75, %v157
    %v359 = vmul.f32 %v357, %v345
    %v360 = vmul.f32 %v358, %v345
    %v361 = vsub.f32 %v185, %v74
    %v362 = vsub.f32 %v185, %v75
    %v363 = vlaneseq
    %v364 = vshrl.u32 %v363, 7
    %v365 = vsub.s32 0, %v364
    %v366 = vrot.slane %v356, %v365
    %v367 = vmul.f32 %v361, %v366
    %v368 = vmul.f32 %v362, %v366
    %v369 = vmul.f32 %v359, %v178
    %v370 = vmul.f32 %v360, %v179
    %v371 = vmul.f32 %v367, %v192
    %v372 = vmul.f32 %v368, %v193
    %v373 = vadd.f32 %v369, %v371
    %v374 = vadd.f32 %v370, %v372
    %v376 = vrot.slane %v77, 7
    %v378 = vsub.f32 %v77, %v376
    %v379 = vrcp.pop %v378
    %v380 = vmul.f32 1.0, %v379
    %v381 = vsub.f32 %v74, %v171
    %v382 = vsub.f32 %v75, %v171
    %v383 = vmul.f32 %v381, %v366
    %v384 = vmul.f32 %v382, %v366
    %v385 = vsub.f32 %v199, %v74
    %v386 = vsub.f32 %v199, %v75
    %v387 = vlaneseq
    %v388 = vshrl.u32 %v387, 7
    %v389 = vsub.s32 1, %v388
    %v390 = vrot.slane %v380, %v389
    %v391 = vmul.f32 %v385, %v390
    %v392 = vmul.f32 %v386, %v390
    %v393 = vmul.f32 %v383, %v192
    %v394 = vmul.f32 %v384, %v193
    %v395 = vmul.f32 %v391, %v206
    %v396 = vmul.f32 %v392, %v207
    %v397 = vadd.f32 %v393, %v395
    %v398 = vadd.f32 %v394, %v396
    %v399 = vsub.f32 %v74, %v185
    %v400 = vsub.f32 %v75, %v185
    %v401 = vmul.f32 %v399, %v390
    %v402 = vmul.f32 %v400, %v390
    %v403 = vsub.f32 %v213, %v74
    %v404 = vsub.f32 %v213, %v75
    %v405 = vlaneseq
    %v406 = vshrl.u32 %v405, 7
    %v407 = vsub.s32 2, %v406
    %v408 = vrot.slane %v380, %v407
    %v409 = vmul.f32 %v403, %v408
    %v410 = vmul.f32 %v404, %v408
    %v411 = vmul.f32 %v401, %v206
    %v412 = vmul.f32 %v402, %v207
    %v413 = vmul.f32 %v409, %v220
    %v414 = vmul.f32 %v410, %v221
    %v415 = vadd.f32 %v411, %v413
    %v416 = vadd.f32 %v412, %v414
    %v417 = vsub.f32 %v74, %v199
    %v418 = vsub.f32 %v75, %v199
    %v419 = vmul.f32 %v417, %v408
    %v420 = vmul.f32 %v418, %v408
    %v421 = vsub.f32 %v227, %v74
    %v422 = vsub.f32 %v227, %v75
    %v423 = vlaneseq
    %v424 = vshrl.u32 %v423, 7
    %v425 = vsub.s32 3, %v424
    %v426 = vrot.slane %v380, %v425
    %v427 = vmul.f32 %v421, %v426
    %v428 = vmul.f32 %v422, %v426
    %v429 = vmul.f32 %v419, %v220
    %v430 = vmul.f32 %v420, %v221
    %v431 = vmul.f32 %v427, %v234
    %v432 = vmul.f32 %v428, %v235
    %v433 = vadd.f32 %v429, %v431
    %v434 = vadd.f32 %v430, %v432
    %v435 = vrot.slane %v76, 6
    %v437 = vsub.f32 %v76, %v435
    %v438 = vrcp.pop %v437
    %v439 = vmul.f32 1.0, %v438
    %v440 = vlaneseq
    %v441 = vshrl.u32 %v440, 7
    %v442 = vsub.s32 2, %v441
    %v443 = vrot.slane %v439, %v442
    %v444 = vmul.f32 %v242, %v443
    %v445 = vmul.f32 %v243, %v443
    %v446 = vlaneseq
    %v447 = vshrl.u32 %v446, 7
    %v448 = vsub.s32 3, %v447
    %v449 = vrot.slane %v439, %v448
    %v450 = vmul.f32 %v268, %v449
    %v451 = vmul.f32 %v269, %v449
    %v452 = vmul.f32 %v444, %v262
    %v453 = vmul.f32 %v445, %v263
    %v454 = vmul.f32 %v450, %v280
    %v455 = vmul.f32 %v451, %v281
    %v456 = vadd.f32 %v452, %v454
    %v457 = vadd.f32 %v453, %v455
    %v458 = vmul.f32 %v264, %v449
    %v459 = vmul.f32 %v265, %v449
    %v460 = vlaneseq
    %v461 = vshrl.u32 %v460, 7
    %v462 = vsub.s32 4, %v461
    %v463 = vrot.slane %v439, %v462
    %v464 = vmul.f32 %v286, %v463
    %v465 = vmul.f32 %v287, %v463
    %v466 = vmul.f32 %v458, %v280
    %v467 = vmul.f32 %v459, %v281
    %v468 = vmul.f32 %v464, %v298
    %v469 = vmul.f32 %v465, %v299
    %v470 = vadd.f32 %v466, %v468
    %v471 = vadd.f32 %v467, %v469
    %v472 = vmul.f32 %v282, %v463
    %v473 = vmul.f32 %v283, %v463
    %v474 = vlaneseq
    %v475 = vshrl.u32 %v474, 7
    %v476 = vsub.s32 5, %v475
    %v477 = vrot.slane %v439, %v476
    %v478 = vmul.f32 %v304, %v477
    %v479 = vmul.f32 %v305, %v477
    %v480 = vmul.f32 %v472, %v298
    %v481 = vmul.f32 %v473, %v299
    %v482 = vmul.f32 %v478, %v316
    %v483 = vmul.f32 %v479, %v317
    %v484 = vadd.f32 %v480, %v482
    %v485 = vadd.f32 %v481, %v483
    %v486 = vmul.f32 %v300, %v477
    %v487 = vmul.f32 %v301, %v477
    %v488 = vlaneseq
    %v489 = vshrl.u32 %v488, 7
    %v490 = vsub.s32 6, %v489
    %v491 = vrot.slane %v439, %v490
    %v492 = vmul.f32 %v322, %v491
    %v493 = vmul.f32 %v323, %v491
    %v494 = vmul.f32 %v486, %v316
    %v495 = vmul.f32 %v487, %v317
    %v496 = vmul.f32 %v492, %v334
    %v497 = vmul.f32 %v493, %v335
    %v498 = vadd.f32 %v494, %v496
    %v499 = vadd.f32 %v495, %v497
    %v500 = vmul.f32 %v318, %v491
    %v501 = vmul.f32 %v319, %v491
    %v502 = vlaneseq
    %v503 = vshrl.u32 %v502, 7
    %v504 = vsub.s32 7, %v503
    %v505 = vrot.slane %v439, %v504
    %v506 = vmul.f32 %v340, %v505
    %v507 = vmul.f32 %v341, %v505
    %v508 = vmul.f32 %v500, %v334
    %v509 = vmul.f32 %v501, %v335
    %v510 = vmul.f32 %v506, %v352
    %v511 = vmul.f32 %v507, %v353
    %v512 = vadd.f32 %v508, %v510
    %v513 = vadd.f32 %v509, %v511
    %v514 = vsub.f32 %v77, %v435
    %v515 = vrcp.pop %v514
    %v516 = vmul.f32 1.0, %v515
    %v517 = vmul.f32 %v336, %v505
    %v518 = vmul.f32 %v337, %v505
    %v519 = vlaneseq
    %v520 = vshrl.u32 %v519, 7
    %v521 = vsub.s32 0, %v520
    %v522 = vrot.slane %v516, %v521
    %v523 = vmul.f32 %v361, %v522
    %v524 = vmul.f32 %v362, %v522
    %v525 = vmul.f32 %v517, %v352
    %v526 = vmul.f32 %v518, %v353
    %v527 = vmul.f32 %v523, %v373
    %v528 = vmul.f32 %v524, %v374
    %v529 = vadd.f32 %v525, %v527
    %v530 = vadd.f32 %v526, %v528
    %v531 = vmul.f32 %v357, %v522
    %v532 = vmul.f32 %v358, %v522
    %v533 = vlaneseq
    %v534 = vshrl.u32 %v533, 7
    %v535 = vsub.s32 1, %v534
    %v536 = vrot.slane %v516, %v535
    %v537 = vmul.f32 %v385, %v536
    %v538 = vmul.f32 %v386, %v536
    %v539 = vmul.f32 %v531, %v373
    %v540 = vmul.f32 %v532, %v374
    %v541 = vmul.f32 %v537, %v397
    %v542 = vmul.f32 %v538, %v398
    %v543 = vadd.f32 %v539, %v541
    %v544 = vadd.f32 %v540, %v542
    %v545 = vrot.slane %v77, 6
    %v547 = vsub.f32 %v77, %v545
    %v548 = vrcp.pop %v547
    %v549 = vmul.f32 1.0, %v548
    %v550 = vmul.f32 %v381, %v536
    %v551 = vmul.f32 %v382, %v536
    %v552 = vlaneseq
    %v553 = vshrl.u32 %v552, 7
    %v554 = vsub.s32 2, %v553
    %v555 = vrot.slane %v549, %v554
    %v556 = vmul.f32 %v403, %v555
    %v557 = vmul.f32 %v404, %v555
    %v558 = vmul.f32 %v550, %v397
    %v559 = vmul.f32 %v551, %v398
    %v560 = vmul.f32 %v556, %v415
    %v561 = vmul.f32 %v557, %v416
    %v562 = vadd.f32 %v558, %v560
    %v563 = vadd.f32 %v559, %v561
    %v564 = vmul.f32 %v399, %v555
    %v565 = vmul.f32 %v400, %v555
    %v566 = vlaneseq
    %v567 = vshrl.u32 %v566, 7
    %v568 = vsub.s32 3, %v567
    %v569 = vrot.slane %v549, %v568
    %v570 = vmul.f32 %v421, %v569
    %v571 = vmul.f32 %v422, %v569
    %v572 = vmul.f32 %v564, %v415
    %v573 = vmul.f32 %v565, %v416
    %v574 = vmul.f32 %v570, %v433
    %v575 = vmul.f32 %v571, %v434
    %v576 = vadd.f32 %v572, %v574
    %v577 = vadd.f32 %v573, %v575
    %v578 = vrot.slane %v76, 5
    %v580 = vsub.f32 %v76, %v578
    %v581 = vrcp.pop %v580
    %v582 = vmul.f32 1.0, %v581
    %v583 = vlaneseq
    %v584 = vshrl.u32 %v583, 7
    %v585 = vsub.s32 3, %v584
    %v586 = vrot.slane %v582, %v585
    %v587 = vmul.f32 %v242, %v586
    %v588 = vmul.f32 %v243, %v586
    %v589 = vlaneseq
    %v590 = vshrl.u32 %v589, 7
    %v591 = vsub.s32 4, %v590
    %v592 = vrot.slane %v582, %v591
    %v593 = vmul.f32 %v286, %v592
    %v594 = vmul.f32 %v287, %v592
    %v595 = vmul.f32 %v587, %v456
    %v596 = vmul.f32 %v588, %v457
    %v597 = vmul.f32 %v593, %v470
    %v598 = vmul.f32 %v594, %v471
    %v599 = vadd.f32 %v595, %v597
    %v600 = vadd.f32 %v596, %v598
    %v601 = vmul.f32 %v264, %v592
    %v602 = vmul.f32 %v265, %v592
    %v603 = vlaneseq
    %v604 = vshrl.u32 %v603, 7
    %v605 = vsub.s32 5, %v604
    %v606 = vrot.slane %v582, %v605
    %v607 = vmul.f32 %v304, %v606
    %v608 = vmul.f32 %v305, %v606
    %v609 = vmul.f32 %v601, %v470
    %v610 = vmul.f32 %v602, %v471
    %v611 = vmul.f32 %v607, %v484
    %v612 = vmul.f32 %v608, %v485
    %v613 = vadd.f32 %v609, %v611
    %v614 = vadd.f32 %v610, %v612
    %v615 = vmul.f32 %v282, %v606
    %v616 = vmul.f32 %v283, %v606
    %v617 = vlaneseq
    %v618 = vshrl.u32 %v617, 7
    %v619 = vsub.s32 6, %v618
    %v620 = vrot.slane %v582, %v619
    %v621 = vmul.f32 %v322, %v620
    %v622 = vmul.f32 %v323, %v620
    %v623 = vmul.f32 %v615, %v484
    %v624 = vmul.f32 %v616, %v485
    %v625 = vmul.f32 %v621, %v498
    %v626 = vmul.f32 %v622, %v499
    %v627 = vadd.f32 %v623, %v625
    %v628 = vadd.f32 %v624, %v626
    %v629 = vmul.f32 %v300, %v620
    %v630 = vmul.f32 %v301, %v620
    %v631 = vlaneseq
    %v632 = vshrl.u32 %v631, 7
    %v633 = vsub.s32 7, %v632
    %v634 = vrot.slane %v582, %v633
    %v635 = vmul.f32 %v340, %v634
    %v636 = vmul.f32 %v341, %v634
    %v637 = vmul.f32 %v629, %v498
    %v638 = vmul.f32 %v630, %v499
    %v639 = vmul.f32 %v635, %v512
    %v640 = vmul.f32 %v636, %v513
    %v641 = vadd.f32 %v637, %v639
    %v642 = vadd.f32 %v638, %v640
    %v643 = vsub.f32 %v77, %v578
    %v644 = vrcp.pop %v643
    %v645 = vmul.f32 1.0, %v644
    %v646 = vmul.f32 %v318, %v634
    %v647 = vmul.f32 %v319, %v634
    %v648 = vlaneseq
    %v649 = vshrl.u32 %v648, 7
    %v650 = vsub.s32 0, %v649
    %v651 = vrot.slane %v645, %v650
    %v652 = vmul.f32 %v361, %v651
    %v653 = vmul.f32 %v362, %v651
    %v654 = vmul.f32 %v646, %v512
    %v655 = vmul.f32 %v647, %v513
    %v656 = vmul.f32 %v652, %v529
    %v657 = vmul.f32 %v653, %v530
    %v658 = vadd.f32 %v654, %v656
    %v659 = vadd.f32 %v655, %v657
    %v660 = vmul.f32 %v336, %v651
    %v661 = vmul.f32 %v337, %v651
    %v662 = vlaneseq
    %v663 = vshrl.u32 %v662, 7
    %v664 = vsub.s32 1, %v663
    %v665 = vrot.slane %v645, %v664
    %v666 = vmul.f32 %v385, %v665
    %v667 = vmul.f32 %v386, %v665
    %v668 = vmul.f32 %v660, %v529
    %v669 = vmul.f32 %v661, %v530
    %v670 = vmul.f32 %v666, %v543
    %v671 = vmul.f32 %v667, %v544
    %v672 = vadd.f32 %v668, %v670
    %v673 = vadd.f32 %v669, %v671
    %v674 = vmul.f32 %v357, %v665
    %v675 = vmul.f32 %v358, %v665
    %v676 = vlaneseq
    %v677 = vshrl.u32 %v676, 7
    %v678 = vsub.s32 2, %v677
    %v679 = vrot.slane %v645, %v678
    %v680 = vmul.f32 %v403, %v679
    %v681 = vmul.f32 %v404, %v679
    %v682 = vmul.f32 %v674, %v543
    %v683 = vmul.f32 %v675, %v544
    %v684 = vmul.f32 %v680, %v562
    %v685 = vmul.f32 %v681, %v563
    %v686 = vadd.f32 %v682, %v684
    %v687 = vadd.f32 %v683, %v685
    %v688 = vrot.slane %v77, 5
    %v690 = vsub.f32 %v77, %v688
    %v691 = vrcp.pop %v690
    %v692 = vmul.f32 1.0, %v691
    %v693 = vmul.f32 %v381, %v679
    %v694 = vmul.f32 %v382, %v679
    %v695 = vlaneseq
    %v696 = vshrl.u32 %v695, 7
    %v697 = vsub.s32 3, %v696
    %v698 = vrot.slane %v692, %v697
    %v699 = vmul.f32 %v421, %v698
    %v700 = vmul.f32 %v422, %v698
    %v701 = vmul.f32 %v693, %v562
    %v702 = vmul.f32 %v694, %v563
    %v703 = vmul.f32 %v699, %v576
    %v704 = vmul.f32 %v700, %v577
    %v705 = vadd.f32 %v701, %v703
    %v706 = vadd.f32 %v702, %v704
    %v707 = vsub.f32 0.0, %v74
    %v708 = vsub.f32 0.0, %v75
    %v709 = vmul.f32 %v707, 1.442695
    %v710 = vpow.pop %v709
    %v711 = vmul.f32 %v708, 1.442695
    %v712 = vpow.pop %v711
    %v713 = vadd.f32 %v710, 1.0
    %v714 = vadd.f32 %v712, 1.0
    %v715 = vrcp.pop %v713
    %v716 = vmul.f32 1.0, %v715
    %v717 = vrcp.pop %v714
    %v718 = vmul.f32 1.0, %v717
    %v719 = vmul.f32 %v74, %v716
    %v720 = vmul.f32 %v75, %v718
    %v721 = vpack.c.bf16 %v720, %v719
    %v722 = vld [vmem:[#allocation7] sm:$0xf]
    %v723 = vld [vmem:[#allocation7 + $0x4] sm:$0xf]
    %v724 = vld [vmem:[#allocation7 + $0x8] sm:$0xf]
    %v725 = vld [vmem:[#allocation7 + $0xc] sm:$0xf]
    %v726 = vld [vmem:[#allocation7 + $0x10] sm:$0xf]
    %v727 = vld [vmem:[#allocation7 + $0x14] sm:$0xf]
    %v728 = vld [vmem:[#allocation7 + $0x18] sm:$0xf]
    %v729 = vld [vmem:[#allocation7 + $0x1c] sm:$0xf]
    %v730 = vld [vmem:[#allocation7 + $0x20] sm:$0xf]
    %v731 = vld [vmem:[#allocation7 + $0x24] sm:$0xf]
    %v732 = vld [vmem:[#allocation7 + $0x28] sm:$0xf]
    %v733 = vld [vmem:[#allocation7 + $0x2c] sm:$0xf]
    %v734 = vld [vmem:[#allocation7 + $0x30] sm:$0xf]
    %v735 = vld [vmem:[#allocation7 + $0x34] sm:$0xf]
    %v736 = vld [vmem:[#allocation7 + $0x38] sm:$0xf]
    %v737 = vld [vmem:[#allocation7 + $0x3c] sm:$0xf]
    %v738 = vpack.c.bf16 %v600, %v599
    %v739 = vld [vmem:[#allocation8] sm:$0xf]
    %v740 = vld [vmem:[#allocation8 + $0x4] sm:$0xf]
    %v741 = vld [vmem:[#allocation8 + $0x8] sm:$0xf]
    %v742 = vld [vmem:[#allocation8 + $0xc] sm:$0xf]
    %v743 = vld [vmem:[#allocation8 + $0x10] sm:$0xf]
    %v744 = vld [vmem:[#allocation8 + $0x14] sm:$0xf]
    %v745 = vld [vmem:[#allocation8 + $0x18] sm:$0xf]
    %v746 = vld [vmem:[#allocation8 + $0x1c] sm:$0xf]
    %v747 = vld [vmem:[#allocation8 + $0x20] sm:$0xf]
    %v748 = vld [vmem:[#allocation8 + $0x24] sm:$0xf]
    %v749 = vld [vmem:[#allocation8 + $0x28] sm:$0xf]
    %v750 = vld [vmem:[#allocation8 + $0x2c] sm:$0xf]
    %v751 = vld [vmem:[#allocation8 + $0x30] sm:$0xf]
    %v752 = vld [vmem:[#allocation8 + $0x34] sm:$0xf]
    %v753 = vld [vmem:[#allocation8 + $0x38] sm:$0xf]
    %v754 = vld [vmem:[#allocation8 + $0x3c] sm:$0xf]
    %v771 = vunpack.c.l.b16 %v739
    %v772 = vunpack.c.l.b16 %v740
    %v773 = vunpack.c.l.b16 %v741
    %v774 = vunpack.c.l.b16 %v742
    %v775 = vunpack.c.l.b16 %v743
    %v776 = vunpack.c.l.b16 %v744
    %v777 = vunpack.c.l.b16 %v745
    %v778 = vunpack.c.l.b16 %v746
    %v779 = vunpack.c.l.b16 %v747
    %v780 = vunpack.c.l.b16 %v748
    %v781 = vunpack.c.l.b16 %v749
    %v782 = vunpack.c.l.b16 %v750
    %v783 = vunpack.c.l.b16 %v751
    %v784 = vunpack.c.l.b16 %v752
    %v785 = vunpack.c.l.b16 %v753
    %v786 = vunpack.c.l.b16 %v754
    %v787 = vpack.c.b16 %v772, %v771
    %v788 = vpack.c.b16 %v774, %v773
    %v789 = vpack.c.b16 %v776, %v775
    %v790 = vpack.c.b16 %v778, %v777
    %v791 = vpack.c.b16 %v780, %v779
    %v792 = vpack.c.b16 %v782, %v781
    %v793 = vpack.c.b16 %v784, %v783
    %v794 = vpack.c.b16 %v786, %v785
    %803 = vmatprep.subr.bf16.mxu0 0
    %804 = vmatpush1.bf16.msra.mxu0 %v794
    %805 = vmatprep.subr.bf16.mxu0 0
    %806 = vmatpush1.bf16.msra.mxu0 %v793
    %807 = vmatprep.subr.bf16.mxu0 0
    %808 = vmatpush1.bf16.msra.mxu0 %v792
    %809 = vmatprep.subr.bf16.mxu0 0
    %810 = vmatpush1.bf16.msra.mxu0 %v791
    %811 = vmatprep.subr.bf16.mxu0 0
    %812 = vmatpush1.bf16.msra.mxu0 %v790
    %813 = vmatprep.subr.bf16.mxu0 0
    %814 = vmatpush1.bf16.msra.mxu0 %v789
    %815 = vmatprep.subr.bf16.mxu0 0
    %816 = vmatpush1.bf16.msra.mxu0 %v788
    %817 = vmatprep.subr.bf16.mxu0 0
    %818 = vmatpush1.bf16.msra.mxu0 %v787
    %819 = vmatprep.subr.bf16.mxu0 0
    %820 = vmatpush2.bf16.msra.mxu0 0
    %821 = vmatprep.subr.bf16.mxu0 0
    %822 = vmatpush2.bf16.msra.mxu0 0
    %823 = vmatprep.subr.bf16.mxu0 0
    %824 = vmatpush2.bf16.msra.mxu0 0
    %825 = vmatprep.subr.bf16.mxu0 0
    %826 = vmatpush2.bf16.msra.mxu0 0
    %827 = vmatprep.subr.bf16.mxu0 0
    %828 = vmatpush2.bf16.msra.mxu0 0
    %829 = vmatprep.subr.bf16.mxu0 0
    %830 = vmatpush2.bf16.msra.mxu0 0
    %831 = vmatprep.subr.bf16.mxu0 0
    %832 = vmatpush2.bf16.msra.mxu0 0
    %833 = vmatprep.subr.bf16.mxu0 0
    %834 = vmatpush2.bf16.msra.mxu0 0
    %835 = vmatprep.mubr.bf16.mxu0 0
    %836 = vmatmul.mubr.bf16.gmra.mxu0 %v738
    %v837 = vpop.f32.mrf.mxu0
    %v838 = vadd.f32 0.0, %v837
    %v839 = vpop.f32.mrf.mxu0
    %v840 = vpop.f32.mrf.mxu0
    %v841 = vadd.f32 0.0, %v840
    %v842 = vpop.f32.mrf.mxu0
    %843 = vdwg.mxu0
    %v860 = vunpack.c.l.b16 %v722
    %v861 = vunpack.c.l.b16 %v723
    %v862 = vunpack.c.l.b16 %v724
    %v863 = vunpack.c.l.b16 %v725
    %v864 = vunpack.c.l.b16 %v726
    %v865 = vunpack.c.l.b16 %v727
    %v866 = vunpack.c.l.b16 %v728
    %v867 = vunpack.c.l.b16 %v729
    %v868 = vunpack.c.l.b16 %v730
    %v869 = vunpack.c.l.b16 %v731
    %v870 = vunpack.c.l.b16 %v732
    %v871 = vunpack.c.l.b16 %v733
    %v872 = vunpack.c.l.b16 %v734
    %v873 = vunpack.c.l.b16 %v735
    %v874 = vunpack.c.l.b16 %v736
    %v875 = vunpack.c.l.b16 %v737
    %v876 = vpack.c.b16 %v861, %v860
    %v877 = vpack.c.b16 %v863, %v862
    %v878 = vpack.c.b16 %v865, %v864
    %v879 = vpack.c.b16 %v867, %v866
    %v880 = vpack.c.b16 %v869, %v868
    %v881 = vpack.c.b16 %v871, %v870
    %v882 = vpack.c.b16 %v873, %v872
    %v883 = vpack.c.b16 %v875, %v874
    %892 = vmatprep.subr.bf16.mxu0 0
    %893 = vmatpush1.bf16.msra.mxu0 %v883
    %894 = vmatprep.subr.bf16.mxu0 0
    %895 = vmatpush1.bf16.msra.mxu0 %v882
    %896 = vmatprep.subr.bf16.mxu0 0
    %897 = vmatpush1.bf16.msra.mxu0 %v881
    %898 = vmatprep.subr.bf16.mxu0 0
    %899 = vmatpush1.bf16.msra.mxu0 %v880
    %900 = vmatprep.subr.bf16.mxu0 0
    %901 = vmatpush1.bf16.msra.mxu0 %v879
    %902 = vmatprep.subr.bf16.mxu0 0
    %903 = vmatpush1.bf16.msra.mxu0 %v878
    %904 = vmatprep.subr.bf16.mxu0 0
    %905 = vmatpush1.bf16.msra.mxu0 %v877
    %906 = vmatprep.subr.bf16.mxu0 0
    %907 = vmatpush1.bf16.msra.mxu0 %v876
    %908 = vmatprep.subr.bf16.mxu0 0
    %909 = vmatpush2.bf16.msra.mxu0 0
    %910 = vmatprep.subr.bf16.mxu0 0
    %911 = vmatpush2.bf16.msra.mxu0 0
    %912 = vmatprep.subr.bf16.mxu0 0
    %913 = vmatpush2.bf16.msra.mxu0 0
    %914 = vmatprep.subr.bf16.mxu0 0
    %915 = vmatpush2.bf16.msra.mxu0 0
    %916 = vmatprep.subr.bf16.mxu0 0
    %917 = vmatpush2.bf16.msra.mxu0 0
    %918 = vmatprep.subr.bf16.mxu0 0
    %919 = vmatpush2.bf16.msra.mxu0 0
    %920 = vmatprep.subr.bf16.mxu0 0
    %921 = vmatpush2.bf16.msra.mxu0 0
    %922 = vmatprep.subr.bf16.mxu0 0
    %923 = vmatpush2.bf16.msra.mxu0 0
    %924 = vmatprep.mubr.bf16.mxu0 0
    %925 = vmatmul.mubr.bf16.gmra.mxu0 %v721
    %v926 = vpop.f32.mrf.mxu0
    %v927 = vadd.f32 %v838, %v926
    %v928 = vpop.f32.mrf.mxu0
    %v929 = vpop.f32.mrf.mxu0
    %v930 = vadd.f32 %v841, %v929
    %v931 = vpop.f32.mrf.mxu0
    %932 = vdwg.mxu0
    %v933 = vpack.c.bf16 %v614, %v613
    %s934 = scalar_lea.vmem [#allocation8], 64
    %v935 = vld [vmem:[%s934] sm:$0xf]
    %v936 = vld [vmem:[%s934 + $0x4] sm:$0xf]
    %v937 = vld [vmem:[%s934 + $0x8] sm:$0xf]
    %v938 = vld [vmem:[%s934 + $0xc] sm:$0xf]
    %v939 = vld [vmem:[%s934 + $0x10] sm:$0xf]
    %v940 = vld [vmem:[%s934 + $0x14] sm:$0xf]
    %v941 = vld [vmem:[%s934 + $0x18] sm:$0xf]
    %v942 = vld [vmem:[%s934 + $0x1c] sm:$0xf]
    %v943 = vld [vmem:[%s934 + $0x20] sm:$0xf]
    %v944 = vld [vmem:[%s934 + $0x24] sm:$0xf]
    %v945 = vld [vmem:[%s934 + $0x28] sm:$0xf]
    %v946 = vld [vmem:[%s934 + $0x2c] sm:$0xf]
    %v947 = vld [vmem:[%s934 + $0x30] sm:$0xf]
    %v948 = vld [vmem:[%s934 + $0x34] sm:$0xf]
    %v949 = vld [vmem:[%s934 + $0x38] sm:$0xf]
    %v950 = vld [vmem:[%s934 + $0x3c] sm:$0xf]
    %v967 = vunpack.c.l.b16 %v935
    %v968 = vunpack.c.l.b16 %v936
    %v969 = vunpack.c.l.b16 %v937
    %v970 = vunpack.c.l.b16 %v938
    %v971 = vunpack.c.l.b16 %v939
    %v972 = vunpack.c.l.b16 %v940
    %v973 = vunpack.c.l.b16 %v941
    %v974 = vunpack.c.l.b16 %v942
    %v975 = vunpack.c.l.b16 %v943
    %v976 = vunpack.c.l.b16 %v944
    %v977 = vunpack.c.l.b16 %v945
    %v978 = vunpack.c.l.b16 %v946
    %v979 = vunpack.c.l.b16 %v947
    %v980 = vunpack.c.l.b16 %v948
    %v981 = vunpack.c.l.b16 %v949
    %v982 = vunpack.c.l.b16 %v950
    %v983 = vpack.c.b16 %v968, %v967
    %v984 = vpack.c.b16 %v970, %v969
    %v985 = vpack.c.b16 %v972, %v971
    %v986 = vpack.c.b16 %v974, %v973
    %v987 = vpack.c.b16 %v976, %v975
    %v988 = vpack.c.b16 %v978, %v977
    %v989 = vpack.c.b16 %v980, %v979
    %v990 = vpack.c.b16 %v982, %v981
    %999 = vmatprep.subr.bf16.mxu0 0
    %1000 = vmatpush1.bf16.msra.mxu0 %v990
    %1001 = vmatprep.subr.bf16.mxu0 0
    %1002 = vmatpush1.bf16.msra.mxu0 %v989
    %1003 = vmatprep.subr.bf16.mxu0 0
    %1004 = vmatpush1.bf16.msra.mxu0 %v988
    %1005 = vmatprep.subr.bf16.mxu0 0
    %1006 = vmatpush1.bf16.msra.mxu0 %v987
    %1007 = vmatprep.subr.bf16.mxu0 0
    %1008 = vmatpush1.bf16.msra.mxu0 %v986
    %1009 = vmatprep.subr.bf16.mxu0 0
    %1010 = vmatpush1.bf16.msra.mxu0 %v985
    %1011 = vmatprep.subr.bf16.mxu0 0
    %1012 = vmatpush1.bf16.msra.mxu0 %v984
    %1013 = vmatprep.subr.bf16.mxu0 0
    %1014 = vmatpush1.bf16.msra.mxu0 %v983
    %1015 = vmatprep.subr.bf16.mxu0 0
    %1016 = vmatpush2.bf16.msra.mxu0 0
    %1017 = vmatprep.subr.bf16.mxu0 0
    %1018 = vmatpush2.bf16.msra.mxu0 0
    %1019 = vmatprep.subr.bf16.mxu0 0
    %1020 = vmatpush2.bf16.msra.mxu0 0
    %1021 = vmatprep.subr.bf16.mxu0 0
    %1022 = vmatpush2.bf16.msra.mxu0 0
    %1023 = vmatprep.subr.bf16.mxu0 0
    %1024 = vmatpush2.bf16.msra.mxu0 0
    %1025 = vmatprep.subr.bf16.mxu0 0
    %1026 = vmatpush2.bf16.msra.mxu0 0
    %1027 = vmatprep.subr.bf16.mxu0 0
    %1028 = vmatpush2.bf16.msra.mxu0 0
    %1029 = vmatprep.subr.bf16.mxu0 0
    %1030 = vmatpush2.bf16.msra.mxu0 0
    %1031 = vmatprep.mubr.bf16.mxu0 0
    %1032 = vmatmul.mubr.bf16.gmra.mxu0 %v933
    %v1033 = vpop.f32.mrf.mxu0
    %v1034 = vadd.f32 0.0, %v1033
    %v1035 = vpop.f32.mrf.mxu0
    %v1036 = vpop.f32.mrf.mxu0
    %v1037 = vadd.f32 0.0, %v1036
    %v1038 = vpop.f32.mrf.mxu0
    %1039 = vdwg.mxu0
    %v1040 = vadd.f32 %v927, %v1034
    %v1041 = vadd.f32 %v930, %v1037
    %v1042 = vpack.c.bf16 %v628, %v627
    %s1043 = scalar_lea.vmem [#allocation8], 128
    %v1044 = vld [vmem:[%s1043] sm:$0xf]
    %v1045 = vld [vmem:[%s1043 + $0x4] sm:$0xf]
    %v1046 = vld [vmem:[%s1043 + $0x8] sm:$0xf]
    %v1047 = vld [vmem:[%s1043 + $0xc] sm:$0xf]
    %v1048 = vld [vmem:[%s1043 + $0x10] sm:$0xf]
    %v1049 = vld [vmem:[%s1043 + $0x14] sm:$0xf]
    %v1050 = vld [vmem:[%s1043 + $0x18] sm:$0xf]
    %v1051 = vld [vmem:[%s1043 + $0x1c] sm:$0xf]
    %v1052 = vld [vmem:[%s1043 + $0x20] sm:$0xf]
    %v1053 = vld [vmem:[%s1043 + $0x24] sm:$0xf]
    %v1054 = vld [vmem:[%s1043 + $0x28] sm:$0xf]
    %v1055 = vld [vmem:[%s1043 + $0x2c] sm:$0xf]
    %v1056 = vld [vmem:[%s1043 + $0x30] sm:$0xf]
    %v1057 = vld [vmem:[%s1043 + $0x34] sm:$0xf]
    %v1058 = vld [vmem:[%s1043 + $0x38] sm:$0xf]
    %v1059 = vld [vmem:[%s1043 + $0x3c] sm:$0xf]
    %v1076 = vunpack.c.l.b16 %v1044
    %v1077 = vunpack.c.l.b16 %v1045
    %v1078 = vunpack.c.l.b16 %v1046
    %v1079 = vunpack.c.l.b16 %v1047
    %v1080 = vunpack.c.l.b16 %v1048
    %v1081 = vunpack.c.l.b16 %v1049
    %v1082 = vunpack.c.l.b16 %v1050
    %v1083 = vunpack.c.l.b16 %v1051
    %v1084 = vunpack.c.l.b16 %v1052
    %v1085 = vunpack.c.l.b16 %v1053
    %v1086 = vunpack.c.l.b16 %v1054
    %v1087 = vunpack.c.l.b16 %v1055
    %v1088 = vunpack.c.l.b16 %v1056
    %v1089 = vunpack.c.l.b16 %v1057
    %v1090 = vunpack.c.l.b16 %v1058
    %v1091 = vunpack.c.l.b16 %v1059
    %v1092 = vpack.c.b16 %v1077, %v1076
    %v1093 = vpack.c.b16 %v1079, %v1078
    %v1094 = vpack.c.b16 %v1081, %v1080
    %v1095 = vpack.c.b16 %v1083, %v1082
    %v1096 = vpack.c.b16 %v1085, %v1084
    %v1097 = vpack.c.b16 %v1087, %v1086
    %v1098 = vpack.c.b16 %v1089, %v1088
    %v1099 = vpack.c.b16 %v1091, %v1090
    %1108 = vmatprep.subr.bf16.mxu0 0
    %1109 = vmatpush1.bf16.msra.mxu0 %v1099
    %1110 = vmatprep.subr.bf16.mxu0 0
    %1111 = vmatpush1.bf16.msra.mxu0 %v1098
    %1112 = vmatprep.subr.bf16.mxu0 0
    %1113 = vmatpush1.bf16.msra.mxu0 %v1097
    %1114 = vmatprep.subr.bf16.mxu0 0
    %1115 = vmatpush1.bf16.msra.mxu0 %v1096
    %1116 = vmatprep.subr.bf16.mxu0 0
    %1117 = vmatpush1.bf16.msra.mxu0 %v1095
    %1118 = vmatprep.subr.bf16.mxu0 0
    %1119 = vmatpush1.bf16.msra.mxu0 %v1094
    %1120 = vmatprep.subr.bf16.mxu0 0
    %1121 = vmatpush1.bf16.msra.mxu0 %v1093
    %1122 = vmatprep.subr.bf16.mxu0 0
    %1123 = vmatpush1.bf16.msra.mxu0 %v1092
    %1124 = vmatprep.subr.bf16.mxu0 0
    %1125 = vmatpush2.bf16.msra.mxu0 0
    %1126 = vmatprep.subr.bf16.mxu0 0
    %1127 = vmatpush2.bf16.msra.mxu0 0
    %1128 = vmatprep.subr.bf16.mxu0 0
    %1129 = vmatpush2.bf16.msra.mxu0 0
    %1130 = vmatprep.subr.bf16.mxu0 0
    %1131 = vmatpush2.bf16.msra.mxu0 0
    %1132 = vmatprep.subr.bf16.mxu0 0
    %1133 = vmatpush2.bf16.msra.mxu0 0
    %1134 = vmatprep.subr.bf16.mxu0 0
    %1135 = vmatpush2.bf16.msra.mxu0 0
    %1136 = vmatprep.subr.bf16.mxu0 0
    %1137 = vmatpush2.bf16.msra.mxu0 0
    %1138 = vmatprep.subr.bf16.mxu0 0
    %1139 = vmatpush2.bf16.msra.mxu0 0
    %1140 = vmatprep.mubr.bf16.mxu0 0
    %1141 = vmatmul.mubr.bf16.gmra.mxu0 %v1042
    %v1142 = vpop.f32.mrf.mxu0
    %v1143 = vadd.f32 0.0, %v1142
    %v1144 = vpop.f32.mrf.mxu0
    %v1145 = vpop.f32.mrf.mxu0
    %v1146 = vadd.f32 0.0, %v1145
    %v1147 = vpop.f32.mrf.mxu0
    %1148 = vdwg.mxu0
    %v1149 = vadd.f32 %v1040, %v1143
    %v1150 = vadd.f32 %v1041, %v1146
    %v1151 = vpack.c.bf16 %v642, %v641
    %s1152 = scalar_lea.vmem [#allocation8], 192
    %v1153 = vld [vmem:[%s1152] sm:$0xf]
    %v1154 = vld [vmem:[%s1152 + $0x4] sm:$0xf]
    %v1155 = vld [vmem:[%s1152 + $0x8] sm:$0xf]
    %v1156 = vld [vmem:[%s1152 + $0xc] sm:$0xf]
    %v1157 = vld [vmem:[%s1152 + $0x10] sm:$0xf]
    %v1158 = vld [vmem:[%s1152 + $0x14] sm:$0xf]
    %v1159 = vld [vmem:[%s1152 + $0x18] sm:$0xf]
    %v1160 = vld [vmem:[%s1152 + $0x1c] sm:$0xf]
    %v1161 = vld [vmem:[%s1152 + $0x20] sm:$0xf]
    %v1162 = vld [vmem:[%s1152 + $0x24] sm:$0xf]
    %v1163 = vld [vmem:[%s1152 + $0x28] sm:$0xf]
    %v1164 = vld [vmem:[%s1152 + $0x2c] sm:$0xf]
    %v1165 = vld [vmem:[%s1152 + $0x30] sm:$0xf]
    %v1166 = vld [vmem:[%s1152 + $0x34] sm:$0xf]
    %v1167 = vld [vmem:[%s1152 + $0x38] sm:$0xf]
    %v1168 = vld [vmem:[%s1152 + $0x3c] sm:$0xf]
    %v1185 = vunpack.c.l.b16 %v1153
    %v1186 = vunpack.c.l.b16 %v1154
    %v1187 = vunpack.c.l.b16 %v1155
    %v1188 = vunpack.c.l.b16 %v1156
    %v1189 = vunpack.c.l.b16 %v1157
    %v1190 = vunpack.c.l.b16 %v1158
    %v1191 = vunpack.c.l.b16 %v1159
    %v1192 = vunpack.c.l.b16 %v1160
    %v1193 = vunpack.c.l.b16 %v1161
    %v1194 = vunpack.c.l.b16 %v1162
    %v1195 = vunpack.c.l.b16 %v1163
    %v1196 = vunpack.c.l.b16 %v1164
    %v1197 = vunpack.c.l.b16 %v1165
    %v1198 = vunpack.c.l.b16 %v1166
    %v1199 = vunpack.c.l.b16 %v1167
    %v1200 = vunpack.c.l.b16 %v1168
    %v1201 = vpack.c.b16 %v1186, %v1185
    %v1202 = vpack.c.b16 %v1188, %v1187
    %v1203 = vpack.c.b16 %v1190, %v1189
    %v1204 = vpack.c.b16 %v1192, %v1191
    %v1205 = vpack.c.b16 %v1194, %v1193
    %v1206 = vpack.c.b16 %v1196, %v1195
    %v1207 = vpack.c.b16 %v1198, %v1197
    %v1208 = vpack.c.b16 %v1200, %v1199
    %1217 = vmatprep.subr.bf16.mxu0 0
    %1218 = vmatpush1.bf16.msra.mxu0 %v1208
    %1219 = vmatprep.subr.bf16.mxu0 0
    %1220 = vmatpush1.bf16.msra.mxu0 %v1207
    %1221 = vmatprep.subr.bf16.mxu0 0
    %1222 = vmatpush1.bf16.msra.mxu0 %v1206
    %1223 = vmatprep.subr.bf16.mxu0 0
    %1224 = vmatpush1.bf16.msra.mxu0 %v1205
    %1225 = vmatprep.subr.bf16.mxu0 0
    %1226 = vmatpush1.bf16.msra.mxu0 %v1204
    %1227 = vmatprep.subr.bf16.mxu0 0
    %1228 = vmatpush1.bf16.msra.mxu0 %v1203
    %1229 = vmatprep.subr.bf16.mxu0 0
    %1230 = vmatpush1.bf16.msra.mxu0 %v1202
    %1231 = vmatprep.subr.bf16.mxu0 0
    %1232 = vmatpush1.bf16.msra.mxu0 %v1201
    %1233 = vmatprep.subr.bf16.mxu0 0
    %1234 = vmatpush2.bf16.msra.mxu0 0
    %1235 = vmatprep.subr.bf16.mxu0 0
    %1236 = vmatpush2.bf16.msra.mxu0 0
    %1237 = vmatprep.subr.bf16.mxu0 0
    %1238 = vmatpush2.bf16.msra.mxu0 0
    %1239 = vmatprep.subr.bf16.mxu0 0
    %1240 = vmatpush2.bf16.msra.mxu0 0
    %1241 = vmatprep.subr.bf16.mxu0 0
    %1242 = vmatpush2.bf16.msra.mxu0 0
    %1243 = vmatprep.subr.bf16.mxu0 0
    %1244 = vmatpush2.bf16.msra.mxu0 0
    %1245 = vmatprep.subr.bf16.mxu0 0
    %1246 = vmatpush2.bf16.msra.mxu0 0
    %1247 = vmatprep.subr.bf16.mxu0 0
    %1248 = vmatpush2.bf16.msra.mxu0 0
    %1249 = vmatprep.mubr.bf16.mxu0 0
    %1250 = vmatmul.mubr.bf16.gmra.mxu0 %v1151
    %v1251 = vpop.f32.mrf.mxu0
    %v1252 = vadd.f32 0.0, %v1251
    %v1253 = vpop.f32.mrf.mxu0
    %v1254 = vpop.f32.mrf.mxu0
    %v1255 = vadd.f32 0.0, %v1254
    %v1256 = vpop.f32.mrf.mxu0
    %1257 = vdwg.mxu0
    %v1258 = vadd.f32 %v1149, %v1252
    %v1259 = vadd.f32 %v1150, %v1255
    %v1260 = vpack.c.bf16 %v659, %v658
    %s1261 = scalar_lea.vmem [#allocation8], 256
    %v1262 = vld [vmem:[%s1261] sm:$0xf]
    %v1263 = vld [vmem:[%s1261 + $0x4] sm:$0xf]
    %v1264 = vld [vmem:[%s1261 + $0x8] sm:$0xf]
    %v1265 = vld [vmem:[%s1261 + $0xc] sm:$0xf]
    %v1266 = vld [vmem:[%s1261 + $0x10] sm:$0xf]
    %v1267 = vld [vmem:[%s1261 + $0x14] sm:$0xf]
    %v1268 = vld [vmem:[%s1261 + $0x18] sm:$0xf]
    %v1269 = vld [vmem:[%s1261 + $0x1c] sm:$0xf]
    %v1270 = vld [vmem:[%s1261 + $0x20] sm:$0xf]
    %v1271 = vld [vmem:[%s1261 + $0x24] sm:$0xf]
    %v1272 = vld [vmem:[%s1261 + $0x28] sm:$0xf]
    %v1273 = vld [vmem:[%s1261 + $0x2c] sm:$0xf]
    %v1274 = vld [vmem:[%s1261 + $0x30] sm:$0xf]
    %v1275 = vld [vmem:[%s1261 + $0x34] sm:$0xf]
    %v1276 = vld [vmem:[%s1261 + $0x38] sm:$0xf]
    %v1277 = vld [vmem:[%s1261 + $0x3c] sm:$0xf]
    %v1294 = vunpack.c.l.b16 %v1262
    %v1295 = vunpack.c.l.b16 %v1263
    %v1296 = vunpack.c.l.b16 %v1264
    %v1297 = vunpack.c.l.b16 %v1265
    %v1298 = vunpack.c.l.b16 %v1266
    %v1299 = vunpack.c.l.b16 %v1267
    %v1300 = vunpack.c.l.b16 %v1268
    %v1301 = vunpack.c.l.b16 %v1269
    %v1302 = vunpack.c.l.b16 %v1270
    %v1303 = vunpack.c.l.b16 %v1271
    %v1304 = vunpack.c.l.b16 %v1272
    %v1305 = vunpack.c.l.b16 %v1273
    %v1306 = vunpack.c.l.b16 %v1274
    %v1307 = vunpack.c.l.b16 %v1275
    %v1308 = vunpack.c.l.b16 %v1276
    %v1309 = vunpack.c.l.b16 %v1277
    %v1310 = vpack.c.b16 %v1295, %v1294
    %v1311 = vpack.c.b16 %v1297, %v1296
    %v1312 = vpack.c.b16 %v1299, %v1298
    %v1313 = vpack.c.b16 %v1301, %v1300
    %v1314 = vpack.c.b16 %v1303, %v1302
    %v1315 = vpack.c.b16 %v1305, %v1304
    %v1316 = vpack.c.b16 %v1307, %v1306
    %v1317 = vpack.c.b16 %v1309, %v1308
    %1326 = vmatprep.subr.bf16.mxu0 0
    %1327 = vmatpush1.bf16.msra.mxu0 %v1317
    %1328 = vmatprep.subr.bf16.mxu0 0
    %1329 = vmatpush1.bf16.msra.mxu0 %v1316
    %1330 = vmatprep.subr.bf16.mxu0 0
    %1331 = vmatpush1.bf16.msra.mxu0 %v1315
    %1332 = vmatprep.subr.bf16.mxu0 0
    %1333 = vmatpush1.bf16.msra.mxu0 %v1314
    %1334 = vmatprep.subr.bf16.mxu0 0
    %1335 = vmatpush1.bf16.msra.mxu0 %v1313
    %1336 = vmatprep.subr.bf16.mxu0 0
    %1337 = vmatpush1.bf16.msra.mxu0 %v1312
    %1338 = vmatprep.subr.bf16.mxu0 0
    %1339 = vmatpush1.bf16.msra.mxu0 %v1311
    %1340 = vmatprep.subr.bf16.mxu0 0
    %1341 = vmatpush1.bf16.msra.mxu0 %v1310
    %1342 = vmatprep.subr.bf16.mxu0 0
    %1343 = vmatpush2.bf16.msra.mxu0 0
    %1344 = vmatprep.subr.bf16.mxu0 0
    %1345 = vmatpush2.bf16.msra.mxu0 0
    %1346 = vmatprep.subr.bf16.mxu0 0
    %1347 = vmatpush2.bf16.msra.mxu0 0
    %1348 = vmatprep.subr.bf16.mxu0 0
    %1349 = vmatpush2.bf16.msra.mxu0 0
    %1350 = vmatprep.subr.bf16.mxu0 0
    %1351 = vmatpush2.bf16.msra.mxu0 0
    %1352 = vmatprep.subr.bf16.mxu0 0
    %1353 = vmatpush2.bf16.msra.mxu0 0
    %1354 = vmatprep.subr.bf16.mxu0 0
    %1355 = vmatpush2.bf16.msra.mxu0 0
    %1356 = vmatprep.subr.bf16.mxu0 0
    %1357 = vmatpush2.bf16.msra.mxu0 0
    %1358 = vmatprep.mubr.bf16.mxu0 0
    %1359 = vmatmul.mubr.bf16.gmra.mxu0 %v1260
    %v1360 = vpop.f32.mrf.mxu0
    %v1361 = vadd.f32 0.0, %v1360
    %v1362 = vpop.f32.mrf.mxu0
    %v1363 = vpop.f32.mrf.mxu0
    %v1364 = vadd.f32 0.0, %v1363
    %v1365 = vpop.f32.mrf.mxu0
    %1366 = vdwg.mxu0
    %v1367 = vadd.f32 %v1258, %v1361
    %v1368 = vadd.f32 %v1259, %v1364
    %v1369 = vpack.c.bf16 %v673, %v672
    %s1370 = scalar_lea.vmem [#allocation8], 320
    %v1371 = vld [vmem:[%s1370] sm:$0xf]
    %v1372 = vld [vmem:[%s1370 + $0x4] sm:$0xf]
    %v1373 = vld [vmem:[%s1370 + $0x8] sm:$0xf]
    %v1374 = vld [vmem:[%s1370 + $0xc] sm:$0xf]
    %v1375 = vld [vmem:[%s1370 + $0x10] sm:$0xf]
    %v1376 = vld [vmem:[%s1370 + $0x14] sm:$0xf]
    %v1377 = vld [vmem:[%s1370 + $0x18] sm:$0xf]
    %v1378 = vld [vmem:[%s1370 + $0x1c] sm:$0xf]
    %v1379 = vld [vmem:[%s1370 + $0x20] sm:$0xf]
    %v1380 = vld [vmem:[%s1370 + $0x24] sm:$0xf]
    %v1381 = vld [vmem:[%s1370 + $0x28] sm:$0xf]
    %v1382 = vld [vmem:[%s1370 + $0x2c] sm:$0xf]
    %v1383 = vld [vmem:[%s1370 + $0x30] sm:$0xf]
    %v1384 = vld [vmem:[%s1370 + $0x34] sm:$0xf]
    %v1385 = vld [vmem:[%s1370 + $0x38] sm:$0xf]
    %v1386 = vld [vmem:[%s1370 + $0x3c] sm:$0xf]
    %v1403 = vunpack.c.l.b16 %v1371
    %v1404 = vunpack.c.l.b16 %v1372
    %v1405 = vunpack.c.l.b16 %v1373
    %v1406 = vunpack.c.l.b16 %v1374
    %v1407 = vunpack.c.l.b16 %v1375
    %v1408 = vunpack.c.l.b16 %v1376
    %v1409 = vunpack.c.l.b16 %v1377
    %v1410 = vunpack.c.l.b16 %v1378
    %v1411 = vunpack.c.l.b16 %v1379
    %v1412 = vunpack.c.l.b16 %v1380
    %v1413 = vunpack.c.l.b16 %v1381
    %v1414 = vunpack.c.l.b16 %v1382
    %v1415 = vunpack.c.l.b16 %v1383
    %v1416 = vunpack.c.l.b16 %v1384
    %v1417 = vunpack.c.l.b16 %v1385
    %v1418 = vunpack.c.l.b16 %v1386
    %v1419 = vpack.c.b16 %v1404, %v1403
    %v1420 = vpack.c.b16 %v1406, %v1405
    %v1421 = vpack.c.b16 %v1408, %v1407
    %v1422 = vpack.c.b16 %v1410, %v1409
    %v1423 = vpack.c.b16 %v1412, %v1411
    %v1424 = vpack.c.b16 %v1414, %v1413
    %v1425 = vpack.c.b16 %v1416, %v1415
    %v1426 = vpack.c.b16 %v1418, %v1417
    %1435 = vmatprep.subr.bf16.mxu0 0
    %1436 = vmatpush1.bf16.msra.mxu0 %v1426
    %1437 = vmatprep.subr.bf16.mxu0 0
    %1438 = vmatpush1.bf16.msra.mxu0 %v1425
    %1439 = vmatprep.subr.bf16.mxu0 0
    %1440 = vmatpush1.bf16.msra.mxu0 %v1424
    %1441 = vmatprep.subr.bf16.mxu0 0
    %1442 = vmatpush1.bf16.msra.mxu0 %v1423
    %1443 = vmatprep.subr.bf16.mxu0 0
    %1444 = vmatpush1.bf16.msra.mxu0 %v1422
    %1445 = vmatprep.subr.bf16.mxu0 0
    %1446 = vmatpush1.bf16.msra.mxu0 %v1421
    %1447 = vmatprep.subr.bf16.mxu0 0
    %1448 = vmatpush1.bf16.msra.mxu0 %v1420
    %1449 = vmatprep.subr.bf16.mxu0 0
    %1450 = vmatpush1.bf16.msra.mxu0 %v1419
    %1451 = vmatprep.subr.bf16.mxu0 0
    %1452 = vmatpush2.bf16.msra.mxu0 0
    %1453 = vmatprep.subr.bf16.mxu0 0
    %1454 = vmatpush2.bf16.msra.mxu0 0
    %1455 = vmatprep.subr.bf16.mxu0 0
    %1456 = vmatpush2.bf16.msra.mxu0 0
    %1457 = vmatprep.subr.bf16.mxu0 0
    %1458 = vmatpush2.bf16.msra.mxu0 0
    %1459 = vmatprep.subr.bf16.mxu0 0
    %1460 = vmatpush2.bf16.msra.mxu0 0
    %1461 = vmatprep.subr.bf16.mxu0 0
    %1462 = vmatpush2.bf16.msra.mxu0 0
    %1463 = vmatprep.subr.bf16.mxu0 0
    %1464 = vmatpush2.bf16.msra.mxu0 0
    %1465 = vmatprep.subr.bf16.mxu0 0
    %1466 = vmatpush2.bf16.msra.mxu0 0
    %1467 = vmatprep.mubr.bf16.mxu0 0
    %1468 = vmatmul.mubr.bf16.gmra.mxu0 %v1369
    %v1469 = vpop.f32.mrf.mxu0
    %v1470 = vadd.f32 0.0, %v1469
    %v1471 = vpop.f32.mrf.mxu0
    %v1472 = vpop.f32.mrf.mxu0
    %v1473 = vadd.f32 0.0, %v1472
    %v1474 = vpop.f32.mrf.mxu0
    %1475 = vdwg.mxu0
    %v1476 = vadd.f32 %v1367, %v1470
    %v1477 = vadd.f32 %v1368, %v1473
    %v1478 = vpack.c.bf16 %v687, %v686
    %s1479 = scalar_lea.vmem [#allocation8], 384
    %v1480 = vld [vmem:[%s1479] sm:$0xf]
    %v1481 = vld [vmem:[%s1479 + $0x4] sm:$0xf]
    %v1482 = vld [vmem:[%s1479 + $0x8] sm:$0xf]
    %v1483 = vld [vmem:[%s1479 + $0xc] sm:$0xf]
    %v1484 = vld [vmem:[%s1479 + $0x10] sm:$0xf]
    %v1485 = vld [vmem:[%s1479 + $0x14] sm:$0xf]
    %v1486 = vld [vmem:[%s1479 + $0x18] sm:$0xf]
    %v1487 = vld [vmem:[%s1479 + $0x1c] sm:$0xf]
    %v1488 = vld [vmem:[%s1479 + $0x20] sm:$0xf]
    %v1489 = vld [vmem:[%s1479 + $0x24] sm:$0xf]
    %v1490 = vld [vmem:[%s1479 + $0x28] sm:$0xf]
    %v1491 = vld [vmem:[%s1479 + $0x2c] sm:$0xf]
    %v1492 = vld [vmem:[%s1479 + $0x30] sm:$0xf]
    %v1493 = vld [vmem:[%s1479 + $0x34] sm:$0xf]
    %v1494 = vld [vmem:[%s1479 + $0x38] sm:$0xf]
    %v1495 = vld [vmem:[%s1479 + $0x3c] sm:$0xf]
    %v1512 = vunpack.c.l.b16 %v1480
    %v1513 = vunpack.c.l.b16 %v1481
    %v1514 = vunpack.c.l.b16 %v1482
    %v1515 = vunpack.c.l.b16 %v1483
    %v1516 = vunpack.c.l.b16 %v1484
    %v1517 = vunpack.c.l.b16 %v1485
    %v1518 = vunpack.c.l.b16 %v1486
    %v1519 = vunpack.c.l.b16 %v1487
    %v1520 = vunpack.c.l.b16 %v1488
    %v1521 = vunpack.c.l.b16 %v1489
    %v1522 = vunpack.c.l.b16 %v1490
    %v1523 = vunpack.c.l.b16 %v1491
    %v1524 = vunpack.c.l.b16 %v1492
    %v1525 = vunpack.c.l.b16 %v1493
    %v1526 = vunpack.c.l.b16 %v1494
    %v1527 = vunpack.c.l.b16 %v1495
    %v1528 = vpack.c.b16 %v1513, %v1512
    %v1529 = vpack.c.b16 %v1515, %v1514
    %v1530 = vpack.c.b16 %v1517, %v1516
    %v1531 = vpack.c.b16 %v1519, %v1518
    %v1532 = vpack.c.b16 %v1521, %v1520
    %v1533 = vpack.c.b16 %v1523, %v1522
    %v1534 = vpack.c.b16 %v1525, %v1524
    %v1535 = vpack.c.b16 %v1527, %v1526
    %1544 = vmatprep.subr.bf16.mxu0 0
    %1545 = vmatpush1.bf16.msra.mxu0 %v1535
    %1546 = vmatprep.subr.bf16.mxu0 0
    %1547 = vmatpush1.bf16.msra.mxu0 %v1534
    %1548 = vmatprep.subr.bf16.mxu0 0
    %1549 = vmatpush1.bf16.msra.mxu0 %v1533
    %1550 = vmatprep.subr.bf16.mxu0 0
    %1551 = vmatpush1.bf16.msra.mxu0 %v1532
    %1552 = vmatprep.subr.bf16.mxu0 0
    %1553 = vmatpush1.bf16.msra.mxu0 %v1531
    %1554 = vmatprep.subr.bf16.mxu0 0
    %1555 = vmatpush1.bf16.msra.mxu0 %v1530
    %1556 = vmatprep.subr.bf16.mxu0 0
    %1557 = vmatpush1.bf16.msra.mxu0 %v1529
    %1558 = vmatprep.subr.bf16.mxu0 0
    %1559 = vmatpush1.bf16.msra.mxu0 %v1528
    %1560 = vmatprep.subr.bf16.mxu0 0
    %1561 = vmatpush2.bf16.msra.mxu0 0
    %1562 = vmatprep.subr.bf16.mxu0 0
    %1563 = vmatpush2.bf16.msra.mxu0 0
    %1564 = vmatprep.subr.bf16.mxu0 0
    %1565 = vmatpush2.bf16.msra.mxu0 0
    %1566 = vmatprep.subr.bf16.mxu0 0
    %1567 = vmatpush2.bf16.msra.mxu0 0
    %1568 = vmatprep.subr.bf16.mxu0 0
    %1569 = vmatpush2.bf16.msra.mxu0 0
    %1570 = vmatprep.subr.bf16.mxu0 0
    %1571 = vmatpush2.bf16.msra.mxu0 0
    %1572 = vmatprep.subr.bf16.mxu0 0
    %1573 = vmatpush2.bf16.msra.mxu0 0
    %1574 = vmatprep.subr.bf16.mxu0 0
    %1575 = vmatpush2.bf16.msra.mxu0 0
    %1576 = vmatprep.mubr.bf16.mxu0 0
    %1577 = vmatmul.mubr.bf16.gmra.mxu0 %v1478
    %v1578 = vpop.f32.mrf.mxu0
    %v1579 = vadd.f32 0.0, %v1578
    %v1580 = vpop.f32.mrf.mxu0
    %v1581 = vpop.f32.mrf.mxu0
    %v1582 = vadd.f32 0.0, %v1581
    %v1583 = vpop.f32.mrf.mxu0
    %1584 = vdwg.mxu0
    %v1585 = vadd.f32 %v1476, %v1579
    %v1586 = vadd.f32 %v1477, %v1582
    %v1587 = vpack.c.bf16 %v706, %v705
    %s1588 = scalar_lea.vmem [#allocation8], 448
    %v1589 = vld [vmem:[%s1588] sm:$0xf]
    %v1590 = vld [vmem:[%s1588 + $0x4] sm:$0xf]
    %v1591 = vld [vmem:[%s1588 + $0x8] sm:$0xf]
    %v1592 = vld [vmem:[%s1588 + $0xc] sm:$0xf]
    %v1593 = vld [vmem:[%s1588 + $0x10] sm:$0xf]
    %v1594 = vld [vmem:[%s1588 + $0x14] sm:$0xf]
    %v1595 = vld [vmem:[%s1588 + $0x18] sm:$0xf]
    %v1596 = vld [vmem:[%s1588 + $0x1c] sm:$0xf]
    %v1597 = vld [vmem:[%s1588 + $0x20] sm:$0xf]
    %v1598 = vld [vmem:[%s1588 + $0x24] sm:$0xf]
    %v1599 = vld [vmem:[%s1588 + $0x28] sm:$0xf]
    %v1600 = vld [vmem:[%s1588 + $0x2c] sm:$0xf]
    %v1601 = vld [vmem:[%s1588 + $0x30] sm:$0xf]
    %v1602 = vld [vmem:[%s1588 + $0x34] sm:$0xf]
    %v1603 = vld [vmem:[%s1588 + $0x38] sm:$0xf]
    %v1604 = vld [vmem:[%s1588 + $0x3c] sm:$0xf]
    %v1621 = vunpack.c.l.b16 %v1589
    %v1622 = vunpack.c.l.b16 %v1590
    %v1623 = vunpack.c.l.b16 %v1591
    %v1624 = vunpack.c.l.b16 %v1592
    %v1625 = vunpack.c.l.b16 %v1593
    %v1626 = vunpack.c.l.b16 %v1594
    %v1627 = vunpack.c.l.b16 %v1595
    %v1628 = vunpack.c.l.b16 %v1596
    %v1629 = vunpack.c.l.b16 %v1597
    %v1630 = vunpack.c.l.b16 %v1598
    %v1631 = vunpack.c.l.b16 %v1599
    %v1632 = vunpack.c.l.b16 %v1600
    %v1633 = vunpack.c.l.b16 %v1601
    %v1634 = vunpack.c.l.b16 %v1602
    %v1635 = vunpack.c.l.b16 %v1603
    %v1636 = vunpack.c.l.b16 %v1604
    %v1637 = vpack.c.b16 %v1622, %v1621
    %v1638 = vpack.c.b16 %v1624, %v1623
    %v1639 = vpack.c.b16 %v1626, %v1625
    %v1640 = vpack.c.b16 %v1628, %v1627
    %v1641 = vpack.c.b16 %v1630, %v1629
    %v1642 = vpack.c.b16 %v1632, %v1631
    %v1643 = vpack.c.b16 %v1634, %v1633
    %v1644 = vpack.c.b16 %v1636, %v1635
    %1653 = vmatprep.subr.bf16.mxu0 0
    %1654 = vmatpush1.bf16.msra.mxu0 %v1644
    %1655 = vmatprep.subr.bf16.mxu0 0
    %1656 = vmatpush1.bf16.msra.mxu0 %v1643
    %1657 = vmatprep.subr.bf16.mxu0 0
    %1658 = vmatpush1.bf16.msra.mxu0 %v1642
    %1659 = vmatprep.subr.bf16.mxu0 0
    %1660 = vmatpush1.bf16.msra.mxu0 %v1641
    %1661 = vmatprep.subr.bf16.mxu0 0
    %1662 = vmatpush1.bf16.msra.mxu0 %v1640
    %1663 = vmatprep.subr.bf16.mxu0 0
    %1664 = vmatpush1.bf16.msra.mxu0 %v1639
    %1665 = vmatprep.subr.bf16.mxu0 0
    %1666 = vmatpush1.bf16.msra.mxu0 %v1638
    %1667 = vmatprep.subr.bf16.mxu0 0
    %1668 = vmatpush1.bf16.msra.mxu0 %v1637
    %1669 = vmatprep.subr.bf16.mxu0 0
    %1670 = vmatpush2.bf16.msra.mxu0 0
    %1671 = vmatprep.subr.bf16.mxu0 0
    %1672 = vmatpush2.bf16.msra.mxu0 0
    %1673 = vmatprep.subr.bf16.mxu0 0
    %1674 = vmatpush2.bf16.msra.mxu0 0
    %1675 = vmatprep.subr.bf16.mxu0 0
    %1676 = vmatpush2.bf16.msra.mxu0 0
    %1677 = vmatprep.subr.bf16.mxu0 0
    %1678 = vmatpush2.bf16.msra.mxu0 0
    %1679 = vmatprep.subr.bf16.mxu0 0
    %1680 = vmatpush2.bf16.msra.mxu0 0
    %1681 = vmatprep.subr.bf16.mxu0 0
    %1682 = vmatpush2.bf16.msra.mxu0 0
    %1683 = vmatprep.subr.bf16.mxu0 0
    %1684 = vmatpush2.bf16.msra.mxu0 0
    %1685 = vmatprep.mubr.bf16.mxu0 0
    %1686 = vmatmul.mubr.bf16.gmra.mxu0 %v1587
    %v1687 = vpop.f32.mrf.mxu0
    %v1688 = vadd.f32 0.0, %v1687
    %v1689 = vpop.f32.mrf.mxu0
    %v1690 = vpop.f32.mrf.mxu0
    %v1691 = vadd.f32 0.0, %v1690
    %v1692 = vpop.f32.mrf.mxu0
    %1693 = vdwg.mxu0
    %v1694 = vadd.f32 %v1585, %v1688
    %v1695 = vadd.f32 %v1586, %v1691
    %1696 = vst [vmem:[#allocation10] sm:$0xff] %v1694
    %1697 = vst [vmem:[#allocation10 + $0x8] sm:$0xff] %v1695
    // Predicated region
    $region34: #{tpu_custom_call.1} parent=1 // pred_check
      _
    $region35: #{tpu_custom_call.1} parent=1 // pred_check_branch
      %1699 = sbr.rel (0) target = $region37
    $region36: #{tpu_custom_call.1} parent=1 // pred_region
      %s1701 = ssub.s32 256, 256
      %1702 = vsyncadd [#allocation4], %s1701
      %s1703 = sshll.u32 [#allocation10], 4
      %s1704 = int_to_ptr.vmem [resolvable:$true] %s1703
      %1709 = dma.vmem_to_hbm [thread:$0]  %s1704, 256, %s4, [#allocation4], 128, 128, 8
    $region37: #{tpu_custom_call.1} parent=1 // pred_fallthru
      _
    // Predicated region
    $region38: #{tpu_custom_call.1} parent=1 // pred_check
      _
    $region39: #{tpu_custom_call.1} parent=1 // pred_check_branch
      %1711 = sbr.rel (0) target = $region41
    $region40: #{tpu_custom_call.1} parent=1 // pred_region
      %1712 = dma.done [#allocation4], 256
    $region41: #{tpu_custom_call.1} parent=1 // pred_fallthru
      _
    %1713 = vsyncpa [#allocation3], 1
    %1714 = vsyncpa [#allocation6], 1
    %1715 = vsyncpa [#allocation9], 1
    %1716 = vsyncpa [#allocation4], 1

</llo_original>
